<compile_context>
chip_gen: v7x
topology: tpu7x:2x2x1
jax: 0.10.0
libtpu: 0.0.40
codegen_flags: <defaults>
</compile_context>

<pallas_src>
from functools import partial

import numpy as np
import jax
import jax.numpy as jnp
from jax.experimental import pallas as pl
from jax.experimental.pallas import tpu as pltpu


# ---------------------------------------------------------------------------
# SALayer hot path on the POOLED tensor: 1x1 conv + ReLU -> dilated 3x3 conv.
# Also emits the per-channel max (== CA global max pool) for free.
# ---------------------------------------------------------------------------
def _sa_kernel(p_ref, mb_ref, w1_ref, b1_ref, w2_ref, b2_ref,
               sa_ref, cmax_ref, stk_ref, *, shifts):
    # p_ref: (C, S)   mb_ref: (1, S) int32 bitmask of tap validity
    # w1: (Crp, C)  b1: (Crp, 1)  w2: (P2, 9*Crp)  b2: (P2, 1)
    # sa_ref: (P2, S)  cmax_ref: (C, 1)  stk_ref: VMEM scratch (9*Crp, S)
    pooled = p_ref[...].astype(jnp.float32)                              # (C, S)
    cmax_ref[...] = jnp.max(pooled, axis=1, keepdims=True)               # CA max stat (free)

    r = jnp.dot(w1_ref[...], pooled,
                preferred_element_type=jnp.float32) + b1_ref[...]        # 1x1 conv (MXU)
    r = jnp.maximum(r, 0.0)                                              # ReLU -> (Crp, S)

    bits = mb_ref[...]                                                   # (1, S) int32
    crp = r.shape[0]
    for k, sh in enumerate(shifts):
        m = ((bits >> k) & 1).astype(jnp.float32)                        # tap validity (VPU)
        shifted = pltpu.roll(r, shift=sh, axis=1) if sh else r           # cheap XLU lane shift
        stk_ref[pl.ds(k * crp, crp), :] = shifted * m                    # 8-aligned rows

    sa_ref[...] = (jnp.dot(w2_ref[...], stk_ref[...],                    # one fused matmul
                           preferred_element_type=jnp.float32) + b2_ref[...])


# ---------------------------------------------------------------------------
# Final fuse: out = x * sigmoid(ca + sa), ca broadcast over space, sa over channels.
# ---------------------------------------------------------------------------
def _combine_kernel(x_ref, ca_ref, sa_ref, o_ref):
    z = ca_ref[...] + sa_ref[...]                                        # (C,1)+(1,T)->(C,T)
    e = jnp.exp(-z)                                                      # EUP
    att = pl.reciprocal(1.0 + e, approx=True)                            # EUP, not VPU divide
    o_ref[...] = (x_ref[...].astype(jnp.float32) * att).astype(o_ref.dtype)


# ---------------------------------------------------------------------------
# Host-side helpers (static shapes only).
# ---------------------------------------------------------------------------
def _make_tap_bits_and_shifts(hp, wp, dilation):
    """(1, S) int32 bitmask (bit k = tap k valid at that lane) and static roll shifts."""
    s = hp * wp
    lane = np.arange(s)
    yy = lane // wp
    xx = lane % wp
    bits = np.zeros((1, s), np.int32)
    shifts = []
    for ky in range(3):
        for kx in range(3):
            k = ky * 3 + kx
            oy = (ky - 1) * dilation
            ox = (kx - 1) * dilation
            ok = (yy + oy >= 0) & (yy + oy < hp) & (xx + ox >= 0) & (xx + ox < wp)
            bits[0] |= ok.astype(np.int32) << k
            delta = oy * wp + ox                 # shifted[l] = r[l + delta] (when valid)
            shifts.append((-delta) % s)          # jnp.roll semantics => shift = -delta
    return jnp.asarray(bits), tuple(shifts)


def _pick_hw_tile(hw, c, itemsize=4, max_block_bytes=4 * 1024 * 1024):
    """Largest 128-multiple divisor of hw whose (C, TL) block fits the byte budget."""
    limit_lanes = max(128, max_block_bytes // max(1, c * itemsize))
    best = 0
    for t in range(128, hw + 1, 128):
        if hw % t == 0 and t <= limit_lanes:
            best = t
    return best if best else hw                  # fallback: full lane extent (still compiles)


def _mosaic_params(block_bytes, dims):
    """Explicit scoped-VMEM limit sized to the double-buffered blocks (32..64 MiB)."""
    limit = int(min(max(32 * 1024 * 1024, 3 * block_bytes), 64 * 1024 * 1024))
    return pltpu.CompilerParams(dimension_semantics=dims, vmem_limit_bytes=limit)


# ---------------------------------------------------------------------------
# Pallas-backed pieces.
# ---------------------------------------------------------------------------
def sa_attention_pallas(pooled, w1, b1, w2, b2, *, hp, wp, dilation):
    """pooled: (N, C, S=hp*wp).  Returns (sa_pooled (N, P2, S) f32, cmax (N, C, 1) f32)."""
    N, C, S = pooled.shape
    P2 = w2.shape[0]
    Cr = w1.shape[0]
    Crp = -(-Cr // 8) * 8                                    # pad to sublane multiple

    w1p = jnp.pad(w1.astype(jnp.float32), ((0, Crp - Cr), (0, 0)))
    b1p = jnp.pad(b1.astype(jnp.float32), (0, Crp - Cr)).reshape(Crp, 1)
    w2t = jnp.pad(w2.astype(jnp.float32).transpose(0, 2, 3, 1),     # (P2,3,3,Cr)->pad Cr
                  ((0, 0), (0, 0), (0, 0), (0, Crp - Cr)))
    w2f = w2t.reshape(P2, 9 * Crp)                                  # tap-major, 8-aligned
    b2c = b2.astype(jnp.float32).reshape(P2, 1)
    mbits, shifts = _make_tap_bits_and_shifts(hp, wp, dilation)

    in_item = pooled.dtype.itemsize
    blk_bytes = (C * S * in_item + P2 * S * 4 + 9 * Crp * S * 4 + S * 4
                 + (Crp * C + Crp + P2 * 9 * Crp + P2 + C) * 4)
    flops = N * (2 * Crp * C * S + 2 * P2 * 9 * Crp * S + 9 * (2 * Crp + 2) * S)
    bytes_acc = N * (C * S * in_item + P2 * S * 4 + C * 4) + S * 4 \
        + (Crp * C + Crp + P2 * 9 * Crp + P2) * 4

    sa_pooled, cmax = pl.pallas_call(
        partial(_sa_kernel, shifts=shifts),
        out_shape=(jax.ShapeDtypeStruct((N, P2, S), jnp.float32),
                   jax.ShapeDtypeStruct((N, C, 1), jnp.float32)),
        grid=(N,),
        in_specs=[
            pl.BlockSpec((None, C, S), lambda n: (n, 0, 0)),        # streamed pooled image
            pl.BlockSpec((1, S), lambda n: (0, 0)),                 # tap bitmask (resident)
            pl.BlockSpec((Crp, C), lambda n: (0, 0)),               # tiny resident weights
            pl.BlockSpec((Crp, 1), lambda n: (0, 0)),
            pl.BlockSpec((P2, 9 * Crp), lambda n: (0, 0)),
            pl.BlockSpec((P2, 1), lambda n: (0, 0)),
        ],
        out_specs=(pl.BlockSpec((None, P2, S), lambda n: (n, 0, 0)),
                   pl.BlockSpec((None, C, 1), lambda n: (n, 0, 0))),
        scratch_shapes=[pltpu.VMEM((9 * Crp, S), jnp.float32)],
        compiler_params=_mosaic_params(blk_bytes, ("parallel",)),
        cost_estimate=pl.CostEstimate(flops=int(flops), transcendentals=0,
                                      bytes_accessed=int(bytes_acc)),
    )(pooled, mbits, w1p, b1p, w2f, b2c)
    return sa_pooled, cmax


def combine_pallas(x, ca, sa_map):
    """out = x * sigmoid(ca[n,c] + sa[n,h,w]), fused elementwise, HW-tiled."""
    N, C, H, W = x.shape
    HW = H * W
    x_item = x.dtype.itemsize
    TL = _pick_hw_tile(HW, C, itemsize=x_item)
    nt = HW // TL

    x2 = x.reshape(N, C, HW)
    ca2 = ca.astype(jnp.float32).reshape(N, C, 1)
    sa2 = sa_map.astype(jnp.float32).reshape(N, 1, HW)

    blk_bytes = 2 * C * TL * max(x_item, 4) + TL * 4 + C * 4
    flops = 4 * N * C * HW
    bytes_acc = N * (2 * C * HW * x_item + HW * 4 + C * 4)

    out = pl.pallas_call(
        _combine_kernel,
        out_shape=jax.ShapeDtypeStruct((N, C, HW), x.dtype),
        grid=(N, nt),
        in_specs=[
            pl.BlockSpec((None, C, TL), lambda n, t: (n, 0, t)),
            pl.BlockSpec((None, C, 1), lambda n, t: (n, 0, 0)),
            pl.BlockSpec((None, 1, TL), lambda n, t: (n, 0, t)),
        ],
        out_specs=pl.BlockSpec((None, C, TL), lambda n, t: (n, 0, t)),
        compiler_params=_mosaic_params(blk_bytes, ("parallel", "parallel")),
        cost_estimate=pl.CostEstimate(flops=int(flops), transcendentals=int(N * C * HW),
                                      bytes_accessed=int(bytes_acc)),
    )(x2, ca2, sa2)
    return out.reshape(N, C, H, W)


def _ca_mlp(mean_nc, max_nc, w1, b1, w2, b2):
    """Tiny (2N, C) CALayer MLP — plain XLA (negligible vs the streamed kernels)."""
    feats = jnp.concatenate([mean_nc, max_nc], axis=0)                   # (2N, C)
    h = jnp.maximum(feats @ w1.astype(jnp.float32).T + b1.astype(jnp.float32), 0.0)
    f2 = h @ w2.astype(jnp.float32).T + b2.astype(jnp.float32)
    n = mean_nc.shape[0]
    return f2[:n] + f2[n:]                                               # (N, C)


def my_layer_forward(x, params, *, dilation=4, pool_stride=2, use_ca=True, use_sa=True):
    """Full MyLayer forward: x * sigmoid(CA(x) + SA(x))."""
    N, C, H, W = x.shape
    if not (use_ca or use_sa):
        return x

    cmax = None
    if use_sa:
        r = pool_stride
        hp, wp = H // r, W // r
        # MaxPool2d as one XLA sweep of x; SA kernel then streams only the x/4 pooled tensor.
        pooled = jax.lax.reduce_window(x, jnp.array(-jnp.inf, x.dtype), jax.lax.max,
                                       (1, 1, r, r), (1, 1, r, r), "VALID")
        pooled = pooled.reshape(N, C, hp * wp)
        sa_pooled, cmax_p = sa_attention_pallas(
            pooled, params["sa_w1"], params["sa_b1"], params["sa_w2"], params["sa_b2"],
            hp=hp, wp=wp, dilation=dilation)
        cmax = cmax_p[..., 0]                                            # (N, C) f32
        # PixelShuffle(pool_stride) layout glue (x/C-sized): (N, P2, S) -> (N, H, W)
        sa_map = sa_pooled.reshape(N, r, r, hp, wp).transpose(0, 3, 1, 4, 2).reshape(N, H, W)
    else:
        sa_map = jnp.zeros((N, H, W), jnp.float32)

    if use_ca:
        mean_nc = jnp.mean(x, axis=(2, 3), dtype=jnp.float32)            # one XLA sweep of x
        if cmax is None:
            cmax = jnp.max(x, axis=(2, 3)).astype(jnp.float32)
        ca = _ca_mlp(mean_nc, cmax, params["ca_w1"], params["ca_b1"],
                     params["ca_w2"], params["ca_b2"])
    else:
        ca = jnp.zeros((N, C), jnp.float32)

    return combine_pallas(x, ca, sa_map)


# ---------------------------------------------------------------------------
# Pure-JAX/XLA reference of the PyTorch MyLayer forward (for validation).
# ---------------------------------------------------------------------------
def my_layer_reference(x, params, *, dilation=4, pool_stride=2, use_ca=True, use_sa=True):
    N, C, H, W = x.shape
    if not (use_ca or use_sa):
        return x
    logits = jnp.zeros((N, C, H, W), x.dtype)
    if use_ca:
        gap = jnp.mean(x, axis=(2, 3))
        gmp = jnp.max(x, axis=(2, 3))
        feats = jnp.concatenate([gap, gmp], axis=0)
        h = jnp.maximum(feats @ params["ca_w1"].T + params["ca_b1"], 0.0)
        f2 = h @ params["ca_w2"].T + params["ca_b2"]
        logits = logits + (f2[:N] + f2[N:])[:, :, None, None]
    if use_sa:
        r = pool_stride
        xp = jax.lax.reduce_window(x, -jnp.inf, jax.lax.max,
                                   (1, 1, r, r), (1, 1, r, r), "VALID")
        y = jax.lax.conv_general_dilated(
            xp, params["sa_w1"][:, :, None, None], (1, 1), "VALID",
            dimension_numbers=("NCHW", "OIHW", "NCHW")) + params["sa_b1"][None, :, None, None]
        y = jnp.maximum(y, 0.0)
        y = jax.lax.conv_general_dilated(
            y, params["sa_w2"], (1, 1),
            [(dilation, dilation), (dilation, dilation)],
            rhs_dilation=(dilation, dilation),
            dimension_numbers=("NCHW", "OIHW", "NCHW")) + params["sa_b2"][None, :, None, None]
        Hp, Wp = H // r, W // r
        y = y.reshape(N, r, r, Hp, Wp).transpose(0, 3, 1, 4, 2).reshape(N, 1, H, W)
        logits = logits + y
    return x * jax.nn.sigmoid(logits)


if __name__ == "__main__":
    # num_channels must be divisible by reduction_ratio=16
    N, C, H, W = 2, 32, 16, 16
    reduction_ratio, dilation, pool_stride = 16, 4, 2      # MyLayer defaults (dilation_value=4)
    Cr = C // reduction_ratio
    P2 = pool_stride ** 2

    key = jax.random.PRNGKey(0)
    keys = jax.random.split(key, 9)
    x = jax.random.normal(keys[0], (N, C, H, W), jnp.float32)
    params = {
        "ca_w1": jax.random.normal(keys[1], (Cr, C), jnp.float32) * 0.1,   # Linear(C -> Cr)
        "ca_b1": jax.random.normal(keys[2], (Cr,), jnp.float32) * 0.1,
        "ca_w2": jax.random.normal(keys[3], (C, Cr), jnp.float32) * 0.1,   # Linear(Cr -> C)
        "ca_b2": jax.random.normal(keys[4], (C,), jnp.float32) * 0.1,
        "sa_w1": jax.random.normal(keys[5], (Cr, C), jnp.float32) * 0.1,   # 1x1 conv
        "sa_b1": jax.random.normal(keys[6], (Cr,), jnp.float32) * 0.1,
        "sa_w2": jax.random.normal(keys[7], (P2, Cr, 3, 3), jnp.float32) * 0.1,  # dilated 3x3
        "sa_b2": jax.random.normal(keys[8], (P2,), jnp.float32) * 0.1,
    }

    fwd = jax.jit(partial(my_layer_forward, dilation=dilation, pool_stride=pool_stride))
    out = jax.block_until_ready(fwd(x, params))

    ref = my_layer_reference(x, params, dilation=dilation, pool_stride=pool_stride)
    assert out.shape == x.shape and out.dtype == x.dtype
    np.testing.assert_allclose(np.asarray(out), np.asarray(ref), atol=2e-2, rtol=2e-2)
    print("KERNEL_OK")
</pallas_src>

<mosaic_0001>
module attributes {stable_mosaic.version = 11 : i64} {
  func.func @_sa_kernel(%arg0: i32, %arg1: memref<1x32x64xf32, #tpu.memory_space<vmem>>, %arg2: memref<1x64xi32, #tpu.memory_space<vmem>>, %arg3: memref<8x32xf32, #tpu.memory_space<vmem>>, %arg4: memref<8x1xf32, #tpu.memory_space<vmem>>, %arg5: memref<4x72xf32, #tpu.memory_space<vmem>>, %arg6: memref<4x1xf32, #tpu.memory_space<vmem>>, %arg7: memref<1x4x64xf32, #tpu.memory_space<vmem>>, %arg8: memref<1x32x1xf32, #tpu.memory_space<vmem>>, %arg9: memref<72x64xf32, #tpu.memory_space<vmem>>) attributes {dimension_semantics = [#tpu.dimension_semantics<parallel>], iteration_bounds = array<i64: 2>, scalar_prefetch = 0 : i64, scratch_operands = 1 : i64, tpu.core_type = #tpu.core_type<tc>, window_params = [{transform_indices = @transform_0, window_bounds = array<i64: 1, 32, 64>}, {pipeline_mode = #tpu.pipeline_mode<synchronous>, transform_indices = @transform_1, window_bounds = array<i64: 1, 64>}, {pipeline_mode = #tpu.pipeline_mode<synchronous>, transform_indices = @transform_2, window_bounds = array<i64: 8, 32>}, {pipeline_mode = #tpu.pipeline_mode<synchronous>, transform_indices = @transform_3, window_bounds = array<i64: 8, 1>}, {pipeline_mode = #tpu.pipeline_mode<synchronous>, transform_indices = @transform_4, window_bounds = array<i64: 4, 72>}, {pipeline_mode = #tpu.pipeline_mode<synchronous>, transform_indices = @transform_5, window_bounds = array<i64: 4, 1>}, {transform_indices = @transform_6, window_bounds = array<i64: 1, 4, 64>}, {transform_indices = @transform_7, window_bounds = array<i64: 1, 32, 1>}]} {
    %c0 = arith.constant 0 : index
    %c0_0 = arith.constant 0 : index
    %c0_1 = arith.constant 0 : index
    %0 = vector.load %arg1[%c0, %c0_0, %c0_1] : memref<1x32x64xf32, #tpu.memory_space<vmem>>, vector<1x32x64xf32>
    %1 = vector.shape_cast %0 : vector<1x32x64xf32> to vector<32x64xf32>
    %cst = arith.constant dense<0xFF800000> : vector<32xf32>
    %2 = vector.multi_reduction <maximumf>, %1, %cst [1] : vector<32x64xf32> to vector<32xf32>
    %3 = vector.shape_cast %2 : vector<32xf32> to vector<32x1xf32>
    %c0_2 = arith.constant 0 : index
    %c0_3 = arith.constant 0 : index
    %c0_4 = arith.constant 0 : index
    %4 = vector.load %arg8[%c0_2, %c0_3, %c0_4] : memref<1x32x1xf32, #tpu.memory_space<vmem>>, vector<1x32x1xf32>
    %5 = vector.shape_cast %4 : vector<1x32x1xf32> to vector<32x1xf32>
    %6 = vector.shape_cast %3 : vector<32x1xf32> to vector<1x32x1xf32>
    tpu.vector_store %arg8[%c0_2, %c0_3, %c0_4], %6 {strides = array<i32>} : memref<1x32x1xf32, #tpu.memory_space<vmem>>, vector<1x32x1xf32>,
    %c0_5 = arith.constant 0 : index
    %c0_6 = arith.constant 0 : index
    %7 = vector.load %arg3[%c0_5, %c0_6] : memref<8x32xf32, #tpu.memory_space<vmem>>, vector<8x32xf32>
    %cst_7 = arith.constant dense<0.000000e+00> : vector<8x64xf32>
    %8 = tpu.matmul %7, %1, %cst_7 {dimension_numbers = #tpu.dot_dimension_numbers<[1], [0], [0], [1], [0, 0, 1, 1], [], []>} : vector<8x32xf32>, vector<32x64xf32>, vector<8x64xf32> -> vector<8x64xf32>
    %c0_8 = arith.constant 0 : index
    %c0_9 = arith.constant 0 : index
    %9 = vector.load %arg4[%c0_8, %c0_9] : memref<8x1xf32, #tpu.memory_space<vmem>>, vector<8x1xf32>
    %10 = vector.broadcast %9 : vector<8x1xf32> to vector<8x64xf32>
    %11 = arith.addf %8, %10 : vector<8x64xf32>
    %cst_10 = arith.constant 0.000000e+00 : f32
    %12 = vector.broadcast %cst_10 : f32 to vector<8x64xf32>
    %13 = arith.maximumf %11, %12 : vector<8x64xf32>
    %c0_11 = arith.constant 0 : index
    %c0_12 = arith.constant 0 : index
    %14 = vector.load %arg2[%c0_11, %c0_12] : memref<1x64xi32, #tpu.memory_space<vmem>>, vector<1x64xi32>
    %c0_i32 = arith.constant 0 : i32
    %15 = vector.broadcast %c0_i32 : i32 to vector<1x64xi32>
    %16 = arith.shrsi %14, %15 : vector<1x64xi32>
    %c1_i32 = arith.constant 1 : i32
    %17 = vector.broadcast %c1_i32 : i32 to vector<1x64xi32>
    %18 = arith.andi %16, %17 : vector<1x64xi32>
    %19 = arith.sitofp %18 : vector<1x64xi32> to vector<1x64xf32>
    %c36_i32 = arith.constant 36 : i32
    %20 = tpu.dynamic_rotate %13 by %c36_i32 dim 1 : vector<8x64xf32>, i32 -> vector<8x64xf32>
    %21 = vector.broadcast %19 : vector<1x64xf32> to vector<8x64xf32>
    %22 = arith.mulf %20, %21 : vector<8x64xf32>
    %c0_13 = arith.constant 0 : index
    %c0_14 = arith.constant 0 : index
    %23 = vector.load %arg9[%c0_13, %c0_14] : memref<72x64xf32, #tpu.memory_space<vmem>>, vector<8x64xf32>
    tpu.vector_store %arg9[%c0_13, %c0_14], %22 {strides = array<i32>} : memref<72x64xf32, #tpu.memory_space<vmem>>, vector<8x64xf32>,
    %c1_i32_15 = arith.constant 1 : i32
    %24 = vector.broadcast %c1_i32_15 : i32 to vector<1x64xi32>
    %25 = arith.shrsi %14, %24 : vector<1x64xi32>
    %c1_i32_16 = arith.constant 1 : i32
    %26 = vector.broadcast %c1_i32_16 : i32 to vector<1x64xi32>
    %27 = arith.andi %25, %26 : vector<1x64xi32>
    %28 = arith.sitofp %27 : vector<1x64xi32> to vector<1x64xf32>
    %c32_i32 = arith.constant 32 : i32
    %29 = tpu.dynamic_rotate %13 by %c32_i32 dim 1 : vector<8x64xf32>, i32 -> vector<8x64xf32>
    %30 = vector.broadcast %28 : vector<1x64xf32> to vector<8x64xf32>
    %31 = arith.mulf %29, %30 : vector<8x64xf32>
    %c8 = arith.constant 8 : index
    %c0_17 = arith.constant 0 : index
    %32 = vector.load %arg9[%c8, %c0_17] : memref<72x64xf32, #tpu.memory_space<vmem>>, vector<8x64xf32>
    tpu.vector_store %arg9[%c8, %c0_17], %31 {strides = array<i32>} : memref<72x64xf32, #tpu.memory_space<vmem>>, vector<8x64xf32>,
    %c2_i32 = arith.constant 2 : i32
    %33 = vector.broadcast %c2_i32 : i32 to vector<1x64xi32>
    %34 = arith.shrsi %14, %33 : vector<1x64xi32>
    %c1_i32_18 = arith.constant 1 : i32
    %35 = vector.broadcast %c1_i32_18 : i32 to vector<1x64xi32>
    %36 = arith.andi %34, %35 : vector<1x64xi32>
    %37 = arith.sitofp %36 : vector<1x64xi32> to vector<1x64xf32>
    %c28_i32 = arith.constant 28 : i32
    %38 = tpu.dynamic_rotate %13 by %c28_i32 dim 1 : vector<8x64xf32>, i32 -> vector<8x64xf32>
    %39 = vector.broadcast %37 : vector<1x64xf32> to vector<8x64xf32>
    %40 = arith.mulf %38, %39 : vector<8x64xf32>
    %c16 = arith.constant 16 : index
    %c0_19 = arith.constant 0 : index
    %41 = vector.load %arg9[%c16, %c0_19] : memref<72x64xf32, #tpu.memory_space<vmem>>, vector<8x64xf32>
    tpu.vector_store %arg9[%c16, %c0_19], %40 {strides = array<i32>} : memref<72x64xf32, #tpu.memory_space<vmem>>, vector<8x64xf32>,
    %c3_i32 = arith.constant 3 : i32
    %42 = vector.broadcast %c3_i32 : i32 to vector<1x64xi32>
    %43 = arith.shrsi %14, %42 : vector<1x64xi32>
    %c1_i32_20 = arith.constant 1 : i32
    %44 = vector.broadcast %c1_i32_20 : i32 to vector<1x64xi32>
    %45 = arith.andi %43, %44 : vector<1x64xi32>
    %46 = arith.sitofp %45 : vector<1x64xi32> to vector<1x64xf32>
    %c4_i32 = arith.constant 4 : i32
    %47 = tpu.dynamic_rotate %13 by %c4_i32 dim 1 : vector<8x64xf32>, i32 -> vector<8x64xf32>
    %48 = vector.broadcast %46 : vector<1x64xf32> to vector<8x64xf32>
    %49 = arith.mulf %47, %48 : vector<8x64xf32>
    %c24 = arith.constant 24 : index
    %c0_21 = arith.constant 0 : index
    %50 = vector.load %arg9[%c24, %c0_21] : memref<72x64xf32, #tpu.memory_space<vmem>>, vector<8x64xf32>
    tpu.vector_store %arg9[%c24, %c0_21], %49 {strides = array<i32>} : memref<72x64xf32, #tpu.memory_space<vmem>>, vector<8x64xf32>,
    %c4_i32_22 = arith.constant 4 : i32
    %51 = vector.broadcast %c4_i32_22 : i32 to vector<1x64xi32>
    %52 = arith.shrsi %14, %51 : vector<1x64xi32>
    %c1_i32_23 = arith.constant 1 : i32
    %53 = vector.broadcast %c1_i32_23 : i32 to vector<1x64xi32>
    %54 = arith.andi %52, %53 : vector<1x64xi32>
    %55 = arith.sitofp %54 : vector<1x64xi32> to vector<1x64xf32>
    %56 = vector.broadcast %55 : vector<1x64xf32> to vector<8x64xf32>
    %57 = arith.mulf %13, %56 : vector<8x64xf32>
    %c32 = arith.constant 32 : index
    %c0_24 = arith.constant 0 : index
    %58 = vector.load %arg9[%c32, %c0_24] : memref<72x64xf32, #tpu.memory_space<vmem>>, vector<8x64xf32>
    tpu.vector_store %arg9[%c32, %c0_24], %57 {strides = array<i32>} : memref<72x64xf32, #tpu.memory_space<vmem>>, vector<8x64xf32>,
    %c5_i32 = arith.constant 5 : i32
    %59 = vector.broadcast %c5_i32 : i32 to vector<1x64xi32>
    %60 = arith.shrsi %14, %59 : vector<1x64xi32>
    %c1_i32_25 = arith.constant 1 : i32
    %61 = vector.broadcast %c1_i32_25 : i32 to vector<1x64xi32>
    %62 = arith.andi %60, %61 : vector<1x64xi32>
    %63 = arith.sitofp %62 : vector<1x64xi32> to vector<1x64xf32>
    %c60_i32 = arith.constant 60 : i32
    %64 = tpu.dynamic_rotate %13 by %c60_i32 dim 1 : vector<8x64xf32>, i32 -> vector<8x64xf32>
    %65 = vector.broadcast %63 : vector<1x64xf32> to vector<8x64xf32>
    %66 = arith.mulf %64, %65 : vector<8x64xf32>
    %c40 = arith.constant 40 : index
    %c0_26 = arith.constant 0 : index
    %67 = vector.load %arg9[%c40, %c0_26] : memref<72x64xf32, #tpu.memory_space<vmem>>, vector<8x64xf32>
    tpu.vector_store %arg9[%c40, %c0_26], %66 {strides = array<i32>} : memref<72x64xf32, #tpu.memory_space<vmem>>, vector<8x64xf32>,
    %c6_i32 = arith.constant 6 : i32
    %68 = vector.broadcast %c6_i32 : i32 to vector<1x64xi32>
    %69 = arith.shrsi %14, %68 : vector<1x64xi32>
    %c1_i32_27 = arith.constant 1 : i32
    %70 = vector.broadcast %c1_i32_27 : i32 to vector<1x64xi32>
    %71 = arith.andi %69, %70 : vector<1x64xi32>
    %72 = arith.sitofp %71 : vector<1x64xi32> to vector<1x64xf32>
    %c36_i32_28 = arith.constant 36 : i32
    %73 = tpu.dynamic_rotate %13 by %c36_i32_28 dim 1 : vector<8x64xf32>, i32 -> vector<8x64xf32>
    %74 = vector.broadcast %72 : vector<1x64xf32> to vector<8x64xf32>
    %75 = arith.mulf %73, %74 : vector<8x64xf32>
    %c48 = arith.constant 48 : index
    %c0_29 = arith.constant 0 : index
    %76 = vector.load %arg9[%c48, %c0_29] : memref<72x64xf32, #tpu.memory_space<vmem>>, vector<8x64xf32>
    tpu.vector_store %arg9[%c48, %c0_29], %75 {strides = array<i32>} : memref<72x64xf32, #tpu.memory_space<vmem>>, vector<8x64xf32>,
    %c7_i32 = arith.constant 7 : i32
    %77 = vector.broadcast %c7_i32 : i32 to vector<1x64xi32>
    %78 = arith.shrsi %14, %77 : vector<1x64xi32>
    %c1_i32_30 = arith.constant 1 : i32
    %79 = vector.broadcast %c1_i32_30 : i32 to vector<1x64xi32>
    %80 = arith.andi %78, %79 : vector<1x64xi32>
    %81 = arith.sitofp %80 : vector<1x64xi32> to vector<1x64xf32>
    %c32_i32_31 = arith.constant 32 : i32
    %82 = tpu.dynamic_rotate %13 by %c32_i32_31 dim 1 : vector<8x64xf32>, i32 -> vector<8x64xf32>
    %83 = vector.broadcast %81 : vector<1x64xf32> to vector<8x64xf32>
    %84 = arith.mulf %82, %83 : vector<8x64xf32>
    %c56 = arith.constant 56 : index
    %c0_32 = arith.constant 0 : index
    %85 = vector.load %arg9[%c56, %c0_32] : memref<72x64xf32, #tpu.memory_space<vmem>>, vector<8x64xf32>
    tpu.vector_store %arg9[%c56, %c0_32], %84 {strides = array<i32>} : memref<72x64xf32, #tpu.memory_space<vmem>>, vector<8x64xf32>,
    %c8_i32 = arith.constant 8 : i32
    %86 = vector.broadcast %c8_i32 : i32 to vector<1x64xi32>
    %87 = arith.shrsi %14, %86 : vector<1x64xi32>
    %c1_i32_33 = arith.constant 1 : i32
    %88 = vector.broadcast %c1_i32_33 : i32 to vector<1x64xi32>
    %89 = arith.andi %87, %88 : vector<1x64xi32>
    %90 = arith.sitofp %89 : vector<1x64xi32> to vector<1x64xf32>
    %c28_i32_34 = arith.constant 28 : i32
    %91 = tpu.dynamic_rotate %13 by %c28_i32_34 dim 1 : vector<8x64xf32>, i32 -> vector<8x64xf32>
    %92 = vector.broadcast %90 : vector<1x64xf32> to vector<8x64xf32>
    %93 = arith.mulf %91, %92 : vector<8x64xf32>
    %c64 = arith.constant 64 : index
    %c0_35 = arith.constant 0 : index
    %94 = vector.load %arg9[%c64, %c0_35] : memref<72x64xf32, #tpu.memory_space<vmem>>, vector<8x64xf32>
    tpu.vector_store %arg9[%c64, %c0_35], %93 {strides = array<i32>} : memref<72x64xf32, #tpu.memory_space<vmem>>, vector<8x64xf32>,
    %c0_36 = arith.constant 0 : index
    %c0_37 = arith.constant 0 : index
    %95 = vector.load %arg5[%c0_36, %c0_37] : memref<4x72xf32, #tpu.memory_space<vmem>>, vector<4x72xf32>
    %c0_38 = arith.constant 0 : index
    %c0_39 = arith.constant 0 : index
    %96 = vector.load %arg9[%c0_38, %c0_39] : memref<72x64xf32, #tpu.memory_space<vmem>>, vector<72x64xf32>
    %cst_40 = arith.constant dense<0.000000e+00> : vector<4x64xf32>
    %97 = tpu.matmul %95, %96, %cst_40 {dimension_numbers = #tpu.dot_dimension_numbers<[1], [0], [0], [1], [0, 0, 1, 1], [], []>} : vector<4x72xf32>, vector<72x64xf32>, vector<4x64xf32> -> vector<4x64xf32>
    %c0_41 = arith.constant 0 : index
    %c0_42 = arith.constant 0 : index
    %98 = vector.load %arg6[%c0_41, %c0_42] : memref<4x1xf32, #tpu.memory_space<vmem>>, vector<4x1xf32>
    %99 = vector.broadcast %98 : vector<4x1xf32> to vector<4x64xf32>
    %100 = arith.addf %97, %99 : vector<4x64xf32>
    %c0_43 = arith.constant 0 : index
    %c0_44 = arith.constant 0 : index
    %c0_45 = arith.constant 0 : index
    %101 = vector.load %arg7[%c0_43, %c0_44, %c0_45] : memref<1x4x64xf32, #tpu.memory_space<vmem>>, vector<1x4x64xf32>
    %102 = vector.shape_cast %101 : vector<1x4x64xf32> to vector<4x64xf32>
    %103 = vector.shape_cast %100 : vector<4x64xf32> to vector<1x4x64xf32>
    tpu.vector_store %arg7[%c0_43, %c0_44, %c0_45], %103 {strides = array<i32>} : memref<1x4x64xf32, #tpu.memory_space<vmem>>, vector<1x4x64xf32>,
    return
  }
  func.func @transform_0(%arg0: i32) -> (i32, i32, i32) {
    %c0_i32 = arith.constant 0 : i32
    %c0_i32_0 = arith.constant 0 : i32
    %c0_i32_1 = arith.constant 0 : i32
    return %arg0, %c0_i32, %c0_i32_0 : i32, i32, i32
  }
  func.func @transform_1(%arg0: i32) -> (i32, i32) {
    %c0_i32 = arith.constant 0 : i32
    %c0_i32_0 = arith.constant 0 : i32
    %c0_i32_1 = arith.constant 0 : i32
    return %c0_i32, %c0_i32_0 : i32, i32
  }
  func.func @transform_2(%arg0: i32) -> (i32, i32) {
    %c0_i32 = arith.constant 0 : i32
    %c0_i32_0 = arith.constant 0 : i32
    %c0_i32_1 = arith.constant 0 : i32
    return %c0_i32, %c0_i32_0 : i32, i32
  }
  func.func @transform_3(%arg0: i32) -> (i32, i32) {
    %c0_i32 = arith.constant 0 : i32
    %c0_i32_0 = arith.constant 0 : i32
    %c0_i32_1 = arith.constant 0 : i32
    return %c0_i32, %c0_i32_0 : i32, i32
  }
  func.func @transform_4(%arg0: i32) -> (i32, i32) {
    %c0_i32 = arith.constant 0 : i32
    %c0_i32_0 = arith.constant 0 : i32
    %c0_i32_1 = arith.constant 0 : i32
    return %c0_i32, %c0_i32_0 : i32, i32
  }
  func.func @transform_5(%arg0: i32) -> (i32, i32) {
    %c0_i32 = arith.constant 0 : i32
    %c0_i32_0 = arith.constant 0 : i32
    %c0_i32_1 = arith.constant 0 : i32
    return %c0_i32, %c0_i32_0 : i32, i32
  }
  func.func @transform_6(%arg0: i32) -> (i32, i32, i32) {
    %c0_i32 = arith.constant 0 : i32
    %c0_i32_0 = arith.constant 0 : i32
    %c0_i32_1 = arith.constant 0 : i32
    return %arg0, %c0_i32, %c0_i32_0 : i32, i32, i32
  }
  func.func @transform_7(%arg0: i32) -> (i32, i32, i32) {
    %c0_i32 = arith.constant 0 : i32
    %c0_i32_0 = arith.constant 0 : i32
    %c0_i32_1 = arith.constant 0 : i32
    return %arg0, %c0_i32, %c0_i32_0 : i32, i32, i32
  }
}

module attributes {stable_mosaic.version = 11 : i64} {
  func.func @_combine_kernel(%arg0: i32, %arg1: i32, %arg2: memref<1x32x256xf32, #tpu.memory_space<vmem>>, %arg3: memref<1x32x1xf32, #tpu.memory_space<vmem>>, %arg4: memref<1x1x256xf32, #tpu.memory_space<vmem>>, %arg5: memref<1x32x256xf32, #tpu.memory_space<vmem>>) attributes {dimension_semantics = [#tpu.dimension_semantics<parallel>, #tpu.dimension_semantics<parallel>], iteration_bounds = array<i64: 2, 1>, scalar_prefetch = 0 : i64, scratch_operands = 0 : i64, tpu.core_type = #tpu.core_type<tc>, window_params = [{transform_indices = @transform_0, window_bounds = array<i64: 1, 32, 256>}, {transform_indices = @transform_1, window_bounds = array<i64: 1, 32, 1>}, {transform_indices = @transform_2, window_bounds = array<i64: 1, 1, 256>}, {transform_indices = @transform_3, window_bounds = array<i64: 1, 32, 256>}]} {
    %c0 = arith.constant 0 : index
    %c0_0 = arith.constant 0 : index
    %c0_1 = arith.constant 0 : index
    %0 = vector.load %arg3[%c0, %c0_0, %c0_1] : memref<1x32x1xf32, #tpu.memory_space<vmem>>, vector<1x32x1xf32>
    %1 = vector.shape_cast %0 : vector<1x32x1xf32> to vector<32x1xf32>
    %c0_2 = arith.constant 0 : index
    %c0_3 = arith.constant 0 : index
    %c0_4 = arith.constant 0 : index
    %2 = vector.load %arg4[%c0_2, %c0_3, %c0_4] : memref<1x1x256xf32, #tpu.memory_space<vmem>>, vector<1x1x256xf32>
    %3 = vector.shape_cast %2 : vector<1x1x256xf32> to vector<1x256xf32>
    %4 = vector.broadcast %1 : vector<32x1xf32> to vector<32x256xf32>
    %5 = vector.broadcast %3 : vector<1x256xf32> to vector<32x256xf32>
    %6 = arith.addf %4, %5 : vector<32x256xf32>
    %cst = arith.constant 0.000000e+00 : f32
    %7 = vector.broadcast %cst : f32 to vector<32x256xf32>
    %8 = arith.subf %7, %6 : vector<32x256xf32>
    %9 = math.exp %8 : vector<32x256xf32>
    %cst_5 = arith.constant 1.000000e+00 : f32
    %10 = vector.broadcast %cst_5 : f32 to vector<32x256xf32>
    %11 = arith.addf %10, %9 : vector<32x256xf32>
    %12 = tpu.reciprocal %11 {approx = true} : vector<32x256xf32> -> vector<32x256xf32>
    %c0_6 = arith.constant 0 : index
    %c0_7 = arith.constant 0 : index
    %c0_8 = arith.constant 0 : index
    %13 = vector.load %arg2[%c0_6, %c0_7, %c0_8] : memref<1x32x256xf32, #tpu.memory_space<vmem>>, vector<1x32x256xf32>
    %14 = vector.shape_cast %13 : vector<1x32x256xf32> to vector<32x256xf32>
    %15 = arith.mulf %14, %12 : vector<32x256xf32>
    %c0_9 = arith.constant 0 : index
    %c0_10 = arith.constant 0 : index
    %c0_11 = arith.constant 0 : index
    %16 = vector.load %arg5[%c0_9, %c0_10, %c0_11] : memref<1x32x256xf32, #tpu.memory_space<vmem>>, vector<1x32x256xf32>
    %17 = vector.shape_cast %16 : vector<1x32x256xf32> to vector<32x256xf32>
    %18 = vector.shape_cast %15 : vector<32x256xf32> to vector<1x32x256xf32>
    tpu.vector_store %arg5[%c0_9, %c0_10, %c0_11], %18 {strides = array<i32>} : memref<1x32x256xf32, #tpu.memory_space<vmem>>, vector<1x32x256xf32>,
    return
  }
  func.func @transform_0(%arg0: i32, %arg1: i32) -> (i32, i32, i32) {
    %c0_i32 = arith.constant 0 : i32
    %c0_i32_0 = arith.constant 0 : i32
    return %arg0, %c0_i32, %arg1 : i32, i32, i32
  }
  func.func @transform_1(%arg0: i32, %arg1: i32) -> (i32, i32, i32) {
    %c0_i32 = arith.constant 0 : i32
    %c0_i32_0 = arith.constant 0 : i32
    %c0_i32_1 = arith.constant 0 : i32
    return %arg0, %c0_i32, %c0_i32_0 : i32, i32, i32
  }
  func.func @transform_2(%arg0: i32, %arg1: i32) -> (i32, i32, i32) {
    %c0_i32 = arith.constant 0 : i32
    %c0_i32_0 = arith.constant 0 : i32
    return %arg0, %c0_i32, %arg1 : i32, i32, i32
  }
  func.func @transform_3(%arg0: i32, %arg1: i32) -> (i32, i32, i32) {
    %c0_i32 = arith.constant 0 : i32
    %c0_i32_0 = arith.constant 0 : i32
    return %arg0, %c0_i32, %arg1 : i32, i32, i32
  }
}

</mosaic_0001>

<llo_original>
// kernel: my_layer_forward.2
$region0: #{my_layer_forward.2}
  #allocation0 [shape = 'u32[]', space=smem, size = 0x4, offset = 0x4, fixed_abs, tag = 'smem constant byte address 0x4 - core index']
  #allocation1 [shape = 'u32[144,128]{1,0:T(1,128)}', space=vmem, size = 0x12000, scoped, tag = 'internal scratch']
  #allocation2 [shape = 'f32[72,64]{1,0:T(8,128)}', space=vmem, size = 0x9000, scoped, tag = 'scratch operand']
  %s0 = inlined_call_operand.vmem [shape: f32[2,32,64], index: 0, kind: input, shape index: {}]
  %s1 = inlined_call_operand.vmem [shape: s32[1,64], index: 1, kind: input, shape index: {}]
  %s2 = inlined_call_operand.vmem [shape: f32[8,32], index: 2, kind: input, shape index: {}]
  %s3 = inlined_call_operand.vmem [shape: f32[8,1], index: 3, kind: input, shape index: {}]
  %s4 = inlined_call_operand.vmem [shape: f32[4,72], index: 4, kind: input, shape index: {}]
  %s5 = inlined_call_operand.vmem [shape: f32[4,1], index: 5, kind: input, shape index: {}]
  %s6 = inlined_call_operand.vmem [shape: f32[2,4,64], index: 6, kind: output, shape index: {0}]
  %s7 = inlined_call_operand.vmem [shape: f32[2,32,1], index: 7, kind: output, shape index: {1}]
  %8 = xla_tuple %s6, %s7
  %s9 = sld [smem:[#allocation0]]
  $region65: #{my_layer_forward.2} parent=0
    _
  %s11 = ssub.s32 1, %s9
  %s12 = scalar_select 0, %s11, %s9
  loop: start=0, step=1, limit=4
  $region2: #{my_layer_forward.2} parent=0 // loop_pre_header
    _
  $region3: #{my_layer_forward.2} parent=0 // loop_header
    %s14 = sphi 0, %s18
    %p15 = scmp.ge.s32.totalorder %s14, 4
    %s24 = sphi 0, %s26
    %s27 = sphi 0, %s24
    %s28 = sphi 0, %s27
    %s44 = sphi 0, %s28
    %s48 = sphi 0, %s48
    %s50 = sphi 0, %s48
    %s51 = sphi 0, %s50
    %s65 = sphi 0, %s51
    %s69 = sphi 0, %s69
    %s71 = sphi 0, %s69
    %s72 = sphi 0, %s71
    %s86 = sphi 0, %s72
    %s90 = sphi 0, %s90
    %s92 = sphi 0, %s90
    %s93 = sphi 0, %s92
    %s107 = sphi 0, %s93
    %s111 = sphi 0, %s111
    %s113 = sphi 0, %s111
    %s114 = sphi 0, %s113
    %s128 = sphi 0, %s114
    %s132 = sphi 0, %s132
    %s134 = sphi 0, %s132
    %s135 = sphi 0, %s134
    %s149 = sphi 0, %s135
    %s155 = sphi 0, %s157
    %s158 = sphi 0, %s155
    %s159 = sphi 0, %s158
    %s175 = sphi 0, %s159
    %s181 = sphi 0, %s183
    %s184 = sphi 0, %s181
    %s185 = sphi 0, %s184
    %s201 = sphi 0, %s185
  $region4: #{my_layer_forward.2} parent=0 // loop_header_branch
    %17 = sbr.rel (%p15) target = $region8
  $region5: #{my_layer_forward.2} parent=0 // loop_body
    %s19 = ssub.s32 %s14, 1
    %s20 = ssub.s32 %s14, 2
    %s21 = sadd.s32 %s14, 1
    %s22 = ssub.s32 %s14, %s21
    %p23 = scmp.eq.s32.totalorder %s22, 0
    %s25 = sadd.s32 %s24, 1
    %s26 = scalar_select %p23, %s24, %s25
    %p29 = pneg %p23
    %p30 = scmp.eq.s32.totalorder %s14, 1
    %p31 = por %p29, %p30
    %p32 = scmp.ne.s32.totalorder %s24, %s27
    %p33 = scmp.eq.s32.totalorder %s14, 0
    %p34 = por %p32, %p33
    %p35 = scmp.ne.s32.totalorder %s24, %s27
    %p36 = scmp.eq.s32.totalorder %s19, 1
    %p37 = por %p35, %p36
    %p38 = scmp.ne.s32.totalorder %s27, %s28
    %p39 = scmp.eq.s32.totalorder %s19, 0
    %p40 = por %p38, %p39
    %p41 = scmp.ne.s32.totalorder %s27, %s28
    %p42 = scmp.eq.s32.totalorder %s20, 1
    %p43 = por %p41, %p42
    %p45 = scmp.ne.s32.totalorder %s28, %s44
    %p46 = scmp.eq.s32.totalorder %s20, 0
    %p47 = por %p45, %p46
    %s49 = sadd.s32 %s48, 1
    %p52 = scmp.eq.s32.totalorder %s14, 1
    %p53 = scmp.ne.s32.totalorder %s48, %s50
    %p54 = scmp.eq.s32.totalorder %s14, 0
    %p55 = por %p53, %p54
    %p56 = scmp.ne.s32.totalorder %s48, %s50
    %p57 = scmp.eq.s32.totalorder %s19, 1
    %p58 = por %p56, %p57
    %p59 = scmp.ne.s32.totalorder %s50, %s51
    %p60 = scmp.eq.s32.totalorder %s19, 0
    %p61 = por %p59, %p60
    %p62 = scmp.ne.s32.totalorder %s50, %s51
    %p63 = scmp.eq.s32.totalorder %s20, 1
    %p64 = por %p62, %p63
    %p66 = scmp.ne.s32.totalorder %s51, %s65
    %p67 = scmp.eq.s32.totalorder %s20, 0
    %p68 = por %p66, %p67
    %s70 = sadd.s32 %s69, 1
    %p73 = scmp.eq.s32.totalorder %s14, 1
    %p74 = scmp.ne.s32.totalorder %s69, %s71
    %p75 = scmp.eq.s32.totalorder %s14, 0
    %p76 = por %p74, %p75
    %p77 = scmp.ne.s32.totalorder %s69, %s71
    %p78 = scmp.eq.s32.totalorder %s19, 1
    %p79 = por %p77, %p78
    %p80 = scmp.ne.s32.totalorder %s71, %s72
    %p81 = scmp.eq.s32.totalorder %s19, 0
    %p82 = por %p80, %p81
    %p83 = scmp.ne.s32.totalorder %s71, %s72
    %p84 = scmp.eq.s32.totalorder %s20, 1
    %p85 = por %p83, %p84
    %p87 = scmp.ne.s32.totalorder %s72, %s86
    %p88 = scmp.eq.s32.totalorder %s20, 0
    %p89 = por %p87, %p88
    %s91 = sadd.s32 %s90, 1
    %p94 = scmp.eq.s32.totalorder %s14, 1
    %p95 = scmp.ne.s32.totalorder %s90, %s92
    %p96 = scmp.eq.s32.totalorder %s14, 0
    %p97 = por %p95, %p96
    %p98 = scmp.ne.s32.totalorder %s90, %s92
    %p99 = scmp.eq.s32.totalorder %s19, 1
    %p100 = por %p98, %p99
    %p101 = scmp.ne.s32.totalorder %s92, %s93
    %p102 = scmp.eq.s32.totalorder %s19, 0
    %p103 = por %p101, %p102
    %p104 = scmp.ne.s32.totalorder %s92, %s93
    %p105 = scmp.eq.s32.totalorder %s20, 1
    %p106 = por %p104, %p105
    %p108 = scmp.ne.s32.totalorder %s93, %s107
    %p109 = scmp.eq.s32.totalorder %s20, 0
    %p110 = por %p108, %p109
    %s112 = sadd.s32 %s111, 1
    %p115 = scmp.eq.s32.totalorder %s14, 1
    %p116 = scmp.ne.s32.totalorder %s111, %s113
    %p117 = scmp.eq.s32.totalorder %s14, 0
    %p118 = por %p116, %p117
    %p119 = scmp.ne.s32.totalorder %s111, %s113
    %p120 = scmp.eq.s32.totalorder %s19, 1
    %p121 = por %p119, %p120
    %p122 = scmp.ne.s32.totalorder %s113, %s114
    %p123 = scmp.eq.s32.totalorder %s19, 0
    %p124 = por %p122, %p123
    %p125 = scmp.ne.s32.totalorder %s113, %s114
    %p126 = scmp.eq.s32.totalorder %s20, 1
    %p127 = por %p125, %p126
    %p129 = scmp.ne.s32.totalorder %s114, %s128
    %p130 = scmp.eq.s32.totalorder %s20, 0
    %p131 = por %p129, %p130
    %s133 = sadd.s32 %s132, 1
    %p136 = scmp.eq.s32.totalorder %s14, 1
    %p137 = scmp.ne.s32.totalorder %s132, %s134
    %p138 = scmp.eq.s32.totalorder %s14, 0
    %p139 = por %p137, %p138
    %p140 = scmp.ne.s32.totalorder %s132, %s134
    %p141 = scmp.eq.s32.totalorder %s19, 1
    %p142 = por %p140, %p141
    %p143 = scmp.ne.s32.totalorder %s134, %s135
    %p144 = scmp.eq.s32.totalorder %s19, 0
    %p145 = por %p143, %p144
    %p146 = scmp.ne.s32.totalorder %s134, %s135
    %p147 = scmp.eq.s32.totalorder %s20, 1
    %p148 = por %p146, %p147
    %p150 = scmp.ne.s32.totalorder %s135, %s149
    %p151 = scmp.eq.s32.totalorder %s20, 0
    %p152 = por %p150, %p151
    %s153 = ssub.s32 %s14, %s21
    %p154 = scmp.eq.s32.totalorder %s153, 0
    %s156 = sadd.s32 %s155, 1
    %s157 = scalar_select %p154, %s155, %s156
    %p160 = pneg %p154
    %p161 = scmp.eq.s32.totalorder %s14, 1
    %p162 = por %p160, %p161
    %p163 = scmp.ne.s32.totalorder %s155, %s158
    %p164 = scmp.eq.s32.totalorder %s14, 0
    %p165 = por %p163, %p164
    %p166 = scmp.ne.s32.totalorder %s155, %s158
    %p167 = scmp.eq.s32.totalorder %s19, 1
    %p168 = por %p166, %p167
    %p169 = scmp.ne.s32.totalorder %s158, %s159
    %p170 = scmp.eq.s32.totalorder %s19, 0
    %p171 = por %p169, %p170
    %p172 = scmp.ne.s32.totalorder %s158, %s159
    %p173 = scmp.eq.s32.totalorder %s20, 1
    %p174 = por %p172, %p173
    %p176 = scmp.ne.s32.totalorder %s159, %s175
    %p177 = scmp.eq.s32.totalorder %s20, 0
    %p178 = por %p176, %p177
    %s179 = ssub.s32 %s14, %s21
    %p180 = scmp.eq.s32.totalorder %s179, 0
    %s182 = sadd.s32 %s181, 1
    %s183 = scalar_select %p180, %s181, %s182
    %p186 = pneg %p180
    %p187 = scmp.eq.s32.totalorder %s14, 1
    %p188 = por %p186, %p187
    %p189 = scmp.ne.s32.totalorder %s181, %s184
    %p190 = scmp.eq.s32.totalorder %s14, 0
    %p191 = por %p189, %p190
    %p192 = scmp.ne.s32.totalorder %s181, %s184
    %p193 = scmp.eq.s32.totalorder %s19, 1
    %p194 = por %p192, %p193
    %p195 = scmp.ne.s32.totalorder %s184, %s185
    %p196 = scmp.eq.s32.totalorder %s19, 0
    %p197 = por %p195, %p196
    %p198 = scmp.ne.s32.totalorder %s184, %s185
    %p199 = scmp.eq.s32.totalorder %s20, 1
    %p200 = por %p198, %p199
    %p202 = scmp.ne.s32.totalorder %s185, %s201
    %p203 = scmp.eq.s32.totalorder %s20, 0
    %p204 = por %p202, %p203
    %p205 = scmp.le.s32.totalorder 1, %s14
    %p206 = scmp.lt.s32.totalorder %s14, 3
    %p207 = pnand %p205, %p206
    %p208 = pneg %p207
    // Predicated region
    $region9: #{my_layer_forward.2} parent=5 // pred_check
      _
    $region10: #{my_layer_forward.2} parent=5 // pred_check_branch
      %210 = sbr.rel (%p207) target = $region12
    $region11: #{my_layer_forward.2} parent=5 // pred_region
      %s211 = ssub.s32 %s14, 1
      // Predicated region
      $region13: #{my_layer_forward.2} parent=11 // pred_check
        %p212 = pneg %p61
      $region14: #{my_layer_forward.2} parent=11 // pred_check_branch
        %214 = sbr.rel (%p212) target = $region16
      $region15: #{my_layer_forward.2} parent=11 // pred_region
        _
      $region16: #{my_layer_forward.2} parent=11 // pred_fallthru
        _
      // Predicated region
      $region17: #{my_layer_forward.2} parent=11 // pred_check
        %p215 = pneg %p82
      $region18: #{my_layer_forward.2} parent=11 // pred_check_branch
        %217 = sbr.rel (%p215) target = $region20
      $region19: #{my_layer_forward.2} parent=11 // pred_region
        _
      $region20: #{my_layer_forward.2} parent=11 // pred_fallthru
        _
      // Predicated region
      $region21: #{my_layer_forward.2} parent=11 // pred_check
        %p218 = pneg %p103
      $region22: #{my_layer_forward.2} parent=11 // pred_check_branch
        %220 = sbr.rel (%p218) target = $region24
      $region23: #{my_layer_forward.2} parent=11 // pred_region
        _
      $region24: #{my_layer_forward.2} parent=11 // pred_fallthru
        _
      // Predicated region
      $region25: #{my_layer_forward.2} parent=11 // pred_check
        %p221 = pneg %p124
      $region26: #{my_layer_forward.2} parent=11 // pred_check_branch
        %223 = sbr.rel (%p221) target = $region28
      $region27: #{my_layer_forward.2} parent=11 // pred_region
        _
      $region28: #{my_layer_forward.2} parent=11 // pred_fallthru
        _
      // Predicated region
      $region29: #{my_layer_forward.2} parent=11 // pred_check
        %p224 = pneg %p145
      $region30: #{my_layer_forward.2} parent=11 // pred_check_branch
        %226 = sbr.rel (%p224) target = $region32
      $region31: #{my_layer_forward.2} parent=11 // pred_region
        _
      $region32: #{my_layer_forward.2} parent=11 // pred_fallthru
        _
    $region12: #{my_layer_forward.2} parent=5 // pred_fallthru
      _
    %p227 = scmp.lt.s32.totalorder %s14, 2
    // Predicated region
    $region33: #{my_layer_forward.2} parent=5 // pred_check
      %p228 = pneg %p227
    $region34: #{my_layer_forward.2} parent=5 // pred_check_branch
      %230 = sbr.rel (%p228) target = $region36
    $region35: #{my_layer_forward.2} parent=5 // pred_region
      // Predicated region
      $region37: #{my_layer_forward.2} parent=35 // pred_check
        %p231 = pneg %p34
      $region38: #{my_layer_forward.2} parent=35 // pred_check_branch
        %233 = sbr.rel (%p231) target = $region40
      $region39: #{my_layer_forward.2} parent=35 // pred_region
        %p234 = scmp.lt.s32.totalorder %s14, 1
        %s235 = scalar_select %p234, %s14, 1
        %s236 = smul.addr %s235, 4
        %s237 = smul.addr %s236, 8
        %s238 = scalar_lea.vmem %s0, %s237
      $region40: #{my_layer_forward.2} parent=35 // pred_fallthru
        _
    $region36: #{my_layer_forward.2} parent=5 // pred_fallthru
      _
    %p239 = scmp.le.s32.totalorder 1, %s14
    %p240 = scmp.lt.s32.totalorder %s14, 3
    %p241 = pnand %p239, %p240
    %p242 = pneg %p241
    // Predicated region
    $region41: #{my_layer_forward.2} parent=5 // pred_check
      _
    $region42: #{my_layer_forward.2} parent=5 // pred_check_branch
      %244 = sbr.rel (%p241) target = $region44
    $region43: #{my_layer_forward.2} parent=5 // pred_region
      %s245 = ssub.s32 %s14, 1
      %p246 = scmp.lt.s32.totalorder %s19, 1
      %s247 = scalar_select %p246, %s19, 1
      %s248 = smul.addr %s247, 4
      %s249 = smul.addr %s248, 8
      %s250 = scalar_lea.vmem %s0, %s249
      %p251 = pneg %p40
      %p252 = pneg %p37
      %p253 = pneg %p61
      %p254 = pneg %p58
      %p255 = pneg %p82
      %p256 = pneg %p79
      %p257 = pneg %p103
      %p258 = pneg %p100
      %p259 = pneg %p124
      %p260 = pneg %p121
      %p261 = pneg %p145
      %p262 = pneg %p142
      %p263 = pneg %p171
      %p264 = pneg %p168
      %p265 = scmp.lt.s32.totalorder %s19, 1
      %s266 = scalar_select %p265, %s19, 1
      %s267 = smul.addr %s266, 4
      %s268 = scalar_lea.vmem %s6, %s267
      %p269 = pneg %p197
      %p270 = pneg %p194
      %p271 = scmp.lt.s32.totalorder %s19, 1
      %s272 = scalar_select %p271, %s19, 1
      %s273 = smul.addr %s272, 4
      %s274 = smul.addr %s273, 8
      %s275 = scalar_lea.vmem %s7, %s274
      %p276 = scmp.lt.s32.totalorder %s19, 1
      %s277 = scalar_select %p276, %s19, 1
      %s278 = smul.addr %s277, 4
      %s279 = smul.addr %s278, 8
      %s280 = scalar_lea.vmem %s0, %s279
      %p281 = scmp.lt.s32.totalorder %s19, 1
      %s282 = scalar_select %p281, %s19, 1
      %s283 = smul.addr %s282, 4
      %s284 = scalar_lea.vmem %s6, %s283
      %p285 = scmp.lt.s32.totalorder %s19, 1
      %s286 = scalar_select %p285, %s19, 1
      %s287 = smul.addr %s286, 4
      %s288 = smul.addr %s287, 8
      %s289 = scalar_lea.vmem %s7, %s288
      %v290 = vld [vmem:[%s280] sm:$0xff]
      %v291 = vld [vmem:[%s280 + $0x8] sm:$0xff]
      %v292 = vld [vmem:[%s280 + $0x10] sm:$0xff]
      %v293 = vld [vmem:[%s280 + $0x18] sm:$0xff]
      %vm294 = vcmask 523264
      %v295 = vsel %vm294, %v290, -inf
      %296 = vmax.xlane.f32.xlu0 %v295
      %v297 = vpop.xlane.xlu0 %296
      %v298 = vsel %vm294, %v291, -inf
      %299 = vmax.xlane.f32.xlu0 %v298
      %v300 = vpop.xlane.xlu0 %299
      %v301 = vsel %vm294, %v292, -inf
      %302 = vmax.xlane.f32.xlu0 %v301
      %v303 = vpop.xlane.xlu0 %302
      %v304 = vsel %vm294, %v293, -inf
      %305 = vmax.xlane.f32.xlu0 %v304
      %v306 = vpop.xlane.xlu0 %305
      %vm307 = vcmask 7168
      %308 = vst.msk [vmem:[%s289] sm:$0xff] %vm307, %v297
      %309 = vst.msk [vmem:[%s289 + $0x8] sm:$0xff] %vm307, %v300
      %310 = vst.msk [vmem:[%s289 + $0x10] sm:$0xff] %vm307, %v303
      %311 = vst.msk [vmem:[%s289 + $0x18] sm:$0xff] %vm307, %v306
      %v312 = vld [vmem:[%s2] sm:$0xff]
      %v313 = vld [vmem:[%s3] sm:$0xff]
      %315 = vset.pattern.permute.xlu0 0
      %316 = vperm.xlu0 %315, %v313
      %v317 = vpop.permute.xlu0 %316
      %vm319 = vcmask 261120
      %v321 = vsel %vm319, %v312, 0
      %323 = vmatprep.subr.mxu0 0.0
      %324 = vmatpush1.msra.mxu0 %v290
      %325 = vmatprep.subr.mxu0 0.0
      %326 = vmatpush1.msra.mxu0 %v291
      %327 = vmatprep.subr.mxu0 0.0
      %328 = vmatpush1.msra.mxu0 %v292
      %329 = vmatprep.subr.mxu0 0.0
      %330 = vmatpush1.msra.mxu0 %v293
      %331 = vmatprep.subr.mxu0 0.0
      %332 = vmatpush1.msra.mxu0 0.0
      %333 = vmatprep.subr.mxu0 0.0
      %334 = vmatpush1.msra.mxu0 0.0
      %335 = vmatprep.subr.mxu0 0.0
      %336 = vmatpush1.msra.mxu0 0.0
      %337 = vmatprep.subr.mxu0 0.0
      %338 = vmatpush1.msra.mxu0 0.0
      %339 = vmatprep.subr.mxu0 0.0
      %340 = vmatpush1.msra.mxu0 0.0
      %341 = vmatprep.subr.mxu0 0.0
      %342 = vmatpush1.msra.mxu0 0.0
      %343 = vmatprep.subr.mxu0 0.0
      %344 = vmatpush1.msra.mxu0 0.0
      %345 = vmatprep.subr.mxu0 0.0
      %346 = vmatpush1.msra.mxu0 0.0
      %347 = vmatprep.subr.mxu0 0.0
      %348 = vmatpush1.msra.mxu0 0.0
      %349 = vmatprep.subr.mxu0 0.0
      %350 = vmatpush1.msra.mxu0 0.0
      %351 = vmatprep.subr.mxu0 0.0
      %352 = vmatpush1.msra.mxu0 0.0
      %353 = vmatprep.subr.mxu0 0.0
      %354 = vmatpush1.msra.mxu0 0.0
      %355 = vmatprep.subr.mxu0 0.0
      %356 = vmatpush1.msra.mxu0 0.0
      %357 = vmatprep.subr.mxu0 0.0
      %358 = vmatpush1.msra.mxu0 0.0
      %359 = vmatprep.subr.mxu0 0.0
      %360 = vmatpush1.msra.mxu0 0.0
      %361 = vmatprep.subr.mxu0 0.0
      %362 = vmatpush1.msra.mxu0 0.0
      %363 = vmatprep.subr.mxu0 0.0
      %364 = vmatpush1.msra.mxu0 0.0
      %365 = vmatprep.subr.mxu0 0.0
      %366 = vmatpush1.msra.mxu0 0.0
      %367 = vmatprep.subr.mxu0 0.0
      %368 = vmatpush1.msra.mxu0 0.0
      %369 = vmatprep.subr.mxu0 0.0
      %370 = vmatpush1.msra.mxu0 0.0
      %371 = vmatprep.subr.mxu0 0.0
      %372 = vmatpush1.msra.mxu0 0.0
      %373 = vmatprep.subr.mxu0 0.0
      %374 = vmatpush1.msra.mxu0 0.0
      %375 = vmatprep.subr.mxu0 0.0
      %376 = vmatpush1.msra.mxu0 0.0
      %377 = vmatprep.subr.mxu0 0.0
      %378 = vmatpush1.msra.mxu0 0.0
      %379 = vmatprep.subr.mxu0 0.0
      %380 = vmatpush1.msra.mxu0 0.0
      %381 = vmatprep.subr.mxu0 0.0
      %382 = vmatpush1.msra.mxu0 0.0
      %383 = vmatprep.subr.mxu0 0.0
      %384 = vmatpush1.msra.mxu0 0.0
      %385 = vmatprep.subr.mxu0 0.0
      %386 = vmatpush1.msra.mxu0 0.0
      %387 = vmatprep.mubr.f32.mxu0 0.0
      %388 = vmatmul.mubr.f32.gmra.mrb[0].mxu0 %v321
      %v389 = vpop.f32.mrb[0].mxu0
      %v390 = vadd.f32 %v317, %v389
      %v391 = vpop.f32.mrb[0].mxu0
      %392 = vdwg.mxu0
      %v393 = vmax.f32 %v390, 0.0
      %v394 = vld [vmem:[%s1] sm:$0x1]
      %v395 = vand.u32 %v394, 1
      %v396 = vcvt.s32.f32 %v395
      %vm397 = vcmask 1048064
      %398 = vrot.lane.b32.xlu0 %v393, 64
      %v399 = vpop.permute.xlu0 %398
      %v400 = vsel %vm397, %v399, %v393
      %401 = vrot.lane.b32.xlu0 %v400, 64
      %v402 = vpop.permute.xlu0 %401
      %v403 = vsel %vm397, %v402, %v393
      %v405 = vlaneseq
      %v406 = vshrl.u32 %v405, 7
      %v407 = vsub.s32 0, %v406
      %v408 = vrot.slane %v396, %v407
      %409 = vrot.lane.b32.xlu0 %v408, 28
      %v410 = vpop.permute.xlu0 %409
      %v412 = vmul.f32 %v403, %v410
      %414 = vrot.lane.b32.xlu0 %v412, 100
      %v415 = vpop.permute.xlu0 %414
      %417 = vst.msk [vmem:[#allocation2] sm:$0xff] %vm294, %v415
      %v418 = vshra.s32 %v394, 1
      %v419 = vand.u32 %v418, 1
      %v420 = vcvt.s32.f32 %v419
      %v422 = vlaneseq
      %v423 = vshrl.u32 %v422, 7
      %v424 = vsub.s32 0, %v423
      %v425 = vrot.slane %v420, %v424
      %426 = vrot.lane.b32.xlu0 %v425, 32
      %v427 = vpop.permute.xlu0 %426
      %v429 = vmul.f32 %v403, %v427
      %431 = vrot.lane.b32.xlu0 %v429, 96
      %v432 = vpop.permute.xlu0 %431
      %434 = vst.msk [vmem:[#allocation2 + $0x8] sm:$0xff] %vm294, %v432
      %v435 = vshra.s32 %v394, 2
      %v436 = vand.u32 %v435, 1
      %v437 = vcvt.s32.f32 %v436
      %v439 = vlaneseq
      %v440 = vshrl.u32 %v439, 7
      %v441 = vsub.s32 0, %v440
      %v442 = vrot.slane %v437, %v441
      %443 = vrot.lane.b32.xlu0 %v442, 36
      %v444 = vpop.permute.xlu0 %443
      %v446 = vmul.f32 %v403, %v444
      %448 = vrot.lane.b32.xlu0 %v446, 92
      %v449 = vpop.permute.xlu0 %448
      %451 = vst.msk [vmem:[#allocation2 + $0x10] sm:$0xff] %vm294, %v449
      %v452 = vshra.s32 %v394, 3
      %v453 = vand.u32 %v452, 1
      %v454 = vcvt.s32.f32 %v453
      %v456 = vlaneseq
      %v457 = vshrl.u32 %v456, 7
      %v458 = vsub.s32 0, %v457
      %v459 = vrot.slane %v454, %v458
      %460 = vrot.lane.b32.xlu0 %v459, 60
      %v461 = vpop.permute.xlu0 %460
      %v463 = vmul.f32 %v403, %v461
      %465 = vrot.lane.b32.xlu0 %v463, 68
      %v466 = vpop.permute.xlu0 %465
      %468 = vst.msk [vmem:[#allocation2 + $0x18] sm:$0xff] %vm294, %v466
      %v469 = vshra.s32 %v394, 4
      %v470 = vand.u32 %v469, 1
      %v471 = vcvt.s32.f32 %v470
      %v473 = vlaneseq
      %v474 = vshrl.u32 %v473, 7
      %v475 = vsub.s32 0, %v474
      %v476 = vrot.slane %v471, %v475
      %v478 = vmul.f32 %v393, %v476
      %479 = vst.msk [vmem:[#allocation2 + $0x20] sm:$0xff] %vm294, %v478
      %v480 = vshra.s32 %v394, 5
      %v481 = vand.u32 %v480, 1
      %v482 = vcvt.s32.f32 %v481
      %v484 = vlaneseq
      %v485 = vshrl.u32 %v484, 7
      %v486 = vsub.s32 0, %v485
      %v487 = vrot.slane %v482, %v486
      %488 = vrot.lane.b32.xlu0 %v487, 4
      %v489 = vpop.permute.xlu0 %488
      %v491 = vmul.f32 %v403, %v489
      %493 = vrot.lane.b32.xlu0 %v491, 124
      %v494 = vpop.permute.xlu0 %493
      %496 = vst.msk [vmem:[#allocation2 + $0x28] sm:$0xff] %vm294, %v494
      %v497 = vshra.s32 %v394, 6
      %v498 = vand.u32 %v497, 1
      %v499 = vcvt.s32.f32 %v498
      %v501 = vlaneseq
      %v502 = vshrl.u32 %v501, 7
      %v503 = vsub.s32 0, %v502
      %v504 = vrot.slane %v499, %v503
      %505 = vrot.lane.b32.xlu0 %v504, 28
      %v506 = vpop.permute.xlu0 %505
      %v508 = vmul.f32 %v403, %v506
      %510 = vrot.lane.b32.xlu0 %v508, 100
      %v511 = vpop.permute.xlu0 %510
      %513 = vst.msk [vmem:[#allocation2 + $0x30] sm:$0xff] %vm294, %v511
      %v514 = vshra.s32 %v394, 7
      %v515 = vand.u32 %v514, 1
      %v516 = vcvt.s32.f32 %v515
      %v518 = vlaneseq
      %v519 = vshrl.u32 %v518, 7
      %v520 = vsub.s32 0, %v519
      %v521 = vrot.slane %v516, %v520
      %522 = vrot.lane.b32.xlu0 %v521, 32
      %v523 = vpop.permute.xlu0 %522
      %v525 = vmul.f32 %v403, %v523
      %527 = vrot.lane.b32.xlu0 %v525, 96
      %v528 = vpop.permute.xlu0 %527
      %530 = vst.msk [vmem:[#allocation2 + $0x38] sm:$0xff] %vm294, %v528
      %v531 = vshra.s32 %v394, 8
      %v532 = vand.u32 %v531, 1
      %v533 = vcvt.s32.f32 %v532
      %v535 = vlaneseq
      %v536 = vshrl.u32 %v535, 7
      %v537 = vsub.s32 0, %v536
      %v538 = vrot.slane %v533, %v537
      %539 = vrot.lane.b32.xlu0 %v538, 36
      %v540 = vpop.permute.xlu0 %539
      %v542 = vmul.f32 %v403, %v540
      %544 = vrot.lane.b32.xlu0 %v542, 92
      %v545 = vpop.permute.xlu0 %544
      %547 = vst.msk [vmem:[#allocation2 + $0x40] sm:$0xff] %vm294, %v545
      %v548 = vld [vmem:[%s4] sm:$0xf]
      %v549 = vld [vmem:[#allocation2] sm:$0xff]
      %v550 = vld [vmem:[#allocation2 + $0x8] sm:$0xff]
      %v551 = vld [vmem:[#allocation2 + $0x10] sm:$0xff]
      %v552 = vld [vmem:[#allocation2 + $0x18] sm:$0xff]
      %v553 = vld [vmem:[#allocation2 + $0x20] sm:$0xff]
      %v554 = vld [vmem:[#allocation2 + $0x28] sm:$0xff]
      %v555 = vld [vmem:[#allocation2 + $0x30] sm:$0xff]
      %v556 = vld [vmem:[#allocation2 + $0x38] sm:$0xff]
      %v557 = vld [vmem:[#allocation2 + $0x40] sm:$0xff]
      %v558 = vld [vmem:[%s5] sm:$0xf]
      %560 = vset.pattern.permute.xlu0 0
      %561 = vperm.xlu0 %560, %v558
      %v562 = vpop.permute.xlu0 %561
      %vm564 = vcmask 588800
      %v566 = vsel %vm564, %v548, 0
      %568 = vmatprep.subr.mxu0 0.0
      %569 = vmatpush1.msra.mxu0 %v549
      %570 = vmatprep.subr.mxu0 0.0
      %571 = vmatpush1.msra.mxu0 %v550
      %572 = vmatprep.subr.mxu0 0.0
      %573 = vmatpush1.msra.mxu0 %v551
      %574 = vmatprep.subr.mxu0 0.0
      %575 = vmatpush1.msra.mxu0 %v552
      %576 = vmatprep.subr.mxu0 0.0
      %577 = vmatpush1.msra.mxu0 %v553
      %578 = vmatprep.subr.mxu0 0.0
      %579 = vmatpush1.msra.mxu0 %v554
      %580 = vmatprep.subr.mxu0 0.0
      %581 = vmatpush1.msra.mxu0 %v555
      %582 = vmatprep.subr.mxu0 0.0
      %583 = vmatpush1.msra.mxu0 %v556
      %584 = vmatprep.subr.mxu0 0.0
      %585 = vmatpush1.msra.mxu0 %v557
      %586 = vmatprep.subr.mxu0 0.0
      %587 = vmatpush1.msra.mxu0 0.0
      %588 = vmatprep.subr.mxu0 0.0
      %589 = vmatpush1.msra.mxu0 0.0
      %590 = vmatprep.subr.mxu0 0.0
      %591 = vmatpush1.msra.mxu0 0.0
      %592 = vmatprep.subr.mxu0 0.0
      %593 = vmatpush1.msra.mxu0 0.0
      %594 = vmatprep.subr.mxu0 0.0
      %595 = vmatpush1.msra.mxu0 0.0
      %596 = vmatprep.subr.mxu0 0.0
      %597 = vmatpush1.msra.mxu0 0.0
      %598 = vmatprep.subr.mxu0 0.0
      %599 = vmatpush1.msra.mxu0 0.0
      %600 = vmatprep.subr.mxu0 0.0
      %601 = vmatpush1.msra.mxu0 0.0
      %602 = vmatprep.subr.mxu0 0.0
      %603 = vmatpush1.msra.mxu0 0.0
      %604 = vmatprep.subr.mxu0 0.0
      %605 = vmatpush1.msra.mxu0 0.0
      %606 = vmatprep.subr.mxu0 0.0
      %607 = vmatpush1.msra.mxu0 0.0
      %608 = vmatprep.subr.mxu0 0.0
      %609 = vmatpush1.msra.mxu0 0.0
      %610 = vmatprep.subr.mxu0 0.0
      %611 = vmatpush1.msra.mxu0 0.0
      %612 = vmatprep.subr.mxu0 0.0
      %613 = vmatpush1.msra.mxu0 0.0
      %614 = vmatprep.subr.mxu0 0.0
      %615 = vmatpush1.msra.mxu0 0.0
      %616 = vmatprep.subr.mxu0 0.0
      %617 = vmatpush1.msra.mxu0 0.0
      %618 = vmatprep.subr.mxu0 0.0
      %619 = vmatpush1.msra.mxu0 0.0
      %620 = vmatprep.subr.mxu0 0.0
      %621 = vmatpush1.msra.mxu0 0.0
      %622 = vmatprep.subr.mxu0 0.0
      %623 = vmatpush1.msra.mxu0 0.0
      %624 = vmatprep.subr.mxu0 0.0
      %625 = vmatpush1.msra.mxu0 0.0
      %626 = vmatprep.subr.mxu0 0.0
      %627 = vmatpush1.msra.mxu0 0.0
      %628 = vmatprep.subr.mxu0 0.0
      %629 = vmatpush1.msra.mxu0 0.0
      %630 = vmatprep.subr.mxu0 0.0
      %631 = vmatpush1.msra.mxu0 0.0
      %632 = vmatprep.mubr.f32.mxu0 0.0
      %633 = vmatmul.mubr.f32.gmra.mrb[0].mxu0 %v566
      %v634 = vpop.f32.mrb[0].mxu0
      %v635 = vadd.f32 %v562, %v634
      %v636 = vpop.f32.mrb[0].mxu0
      %637 = vdwg.mxu0
      %vm638 = vcmask 519168
      %639 = vst.msk [vmem:[%s284] sm:$0xf] %vm638, %v635
      %p640 = scmp.lt.s32.totalorder %s19, 1
      %s641 = scalar_select %p640, %s19, 1
      %s642 = smul.addr %s641, 4
      %s643 = scalar_lea.vmem %s6, %s642
      %p644 = scmp.lt.s32.totalorder %s19, 1
      %s645 = scalar_select %p644, %s19, 1
      %s646 = smul.addr %s645, 4
      %s647 = smul.addr %s646, 8
      %s648 = scalar_lea.vmem %s7, %s647
      // Predicated region
      $region45: #{my_layer_forward.2} parent=43 // pred_check
        %p649 = pneg %p168
      $region46: #{my_layer_forward.2} parent=43 // pred_check_branch
        %651 = sbr.rel (%p649) target = $region48
      $region47: #{my_layer_forward.2} parent=43 // pred_region
        _
      $region48: #{my_layer_forward.2} parent=43 // pred_fallthru
        _
      // Predicated region
      $region49: #{my_layer_forward.2} parent=43 // pred_check
        %p652 = pneg %p194
      $region50: #{my_layer_forward.2} parent=43 // pred_check_branch
        %654 = sbr.rel (%p652) target = $region52
      $region51: #{my_layer_forward.2} parent=43 // pred_region
        _
      $region52: #{my_layer_forward.2} parent=43 // pred_fallthru
        _
    $region44: #{my_layer_forward.2} parent=5 // pred_fallthru
      _
    %p655 = scmp.le.s32.totalorder 2, %s14
    // Predicated region
    $region53: #{my_layer_forward.2} parent=5 // pred_check
      %p656 = pneg %p655
    $region54: #{my_layer_forward.2} parent=5 // pred_check_branch
      %658 = sbr.rel (%p656) target = $region56
    $region55: #{my_layer_forward.2} parent=5 // pred_region
      %s659 = ssub.s32 %s14, 2
      // Predicated region
      $region57: #{my_layer_forward.2} parent=55 // pred_check
        %p660 = pneg %p174
      $region58: #{my_layer_forward.2} parent=55 // pred_check_branch
        %662 = sbr.rel (%p660) target = $region60
      $region59: #{my_layer_forward.2} parent=55 // pred_region
        %p663 = scmp.lt.s32.totalorder %s20, 1
        %s664 = scalar_select %p663, %s20, 1
        %s665 = smul.addr %s664, 4
        %s666 = scalar_lea.vmem %s6, %s665
      $region60: #{my_layer_forward.2} parent=55 // pred_fallthru
        _
      // Predicated region
      $region61: #{my_layer_forward.2} parent=55 // pred_check
        %p667 = pneg %p200
      $region62: #{my_layer_forward.2} parent=55 // pred_check_branch
        %669 = sbr.rel (%p667) target = $region64
      $region63: #{my_layer_forward.2} parent=55 // pred_region
        %p670 = scmp.lt.s32.totalorder %s20, 1
        %s671 = scalar_select %p670, %s20, 1
        %s672 = smul.addr %s671, 4
        %s673 = smul.addr %s672, 8
        %s674 = scalar_lea.vmem %s7, %s673
      $region64: #{my_layer_forward.2} parent=55 // pred_fallthru
        _
    $region56: #{my_layer_forward.2} parent=5 // pred_fallthru
      _
  $region6: #{my_layer_forward.2} parent=0 // loop_footer
    %s18 = sadd.s32 1, %s14
  $region7: #{my_layer_forward.2} parent=0 // loop_footer_branch
    %13 = sbr.rel target = $region3
  $region8: #{my_layer_forward.2} parent=0 // loop_exit
    _

// kernel: my_layer_forward.3
$region0: #{my_layer_forward.3}
  #allocation0 [shape = 'u32[]', space=smem, size = 0x4, offset = 0x4, fixed_abs, tag = 'smem constant byte address 0x4 - core index']
  #allocation1 [shape = 'u32[144,128]{1,0:T(1,128)}', space=vmem, size = 0x12000, scoped, tag = 'internal scratch']
  %s0 = inlined_call_operand.vmem [shape: f32[2,32,256], index: 0, kind: input, shape index: {}]
  %s1 = inlined_call_operand.vmem [shape: f32[2,32,1], index: 1, kind: input, shape index: {}]
  %s2 = inlined_call_operand.vmem [shape: f32[2,1,256], index: 2, kind: input, shape index: {}]
  %s3 = inlined_call_operand.vmem [shape: f32[2,32,256], index: 3, kind: output, shape index: {}]
  %s4 = sld [smem:[#allocation0]]
  $region45: #{my_layer_forward.3} parent=0
    _
  %s6 = ssub.s32 1, %s4
  %s7 = scalar_select 0, %s6, %s4
  loop: start=0, step=1, limit=4
  $region2: #{my_layer_forward.3} parent=0 // loop_pre_header
    _
  $region3: #{my_layer_forward.3} parent=0 // loop_header
    %s9 = sphi 0, %s13
    %p10 = scmp.ge.s32.totalorder %s9, 4
    %s16 = sphi 0, %s28
    %s17 = sphi 0, %s24
    %s18 = sphi 0, %s16
    %s19 = sphi 0, %s17
    %s20 = sphi 0, %s18
    %s21 = sphi 0, %s19
    %s33 = sphi 0, %s35
    %s36 = sphi 0, %s33
    %s37 = sphi 0, %s36
    %s53 = sphi 0, %s37
    %s59 = sphi 0, %s61
    %s62 = sphi 0, %s59
    %s63 = sphi 0, %s62
    %s79 = sphi 0, %s63
    %s87 = sphi 0, %s89
    %s90 = sphi 0, %s87
    %s91 = sphi 0, %s90
    %s107 = sphi 0, %s91
    %s115 = sphi 0, %s117
    %s118 = sphi 0, %s115
    %s119 = sphi 0, %s118
    %s135 = sphi 0, %s119
  $region4: #{my_layer_forward.3} parent=0 // loop_header_branch
    %12 = sbr.rel (%p10) target = $region8
  $region5: #{my_layer_forward.3} parent=0 // loop_body
    %s14 = ssub.s32 %s9, 1
    %s15 = ssub.s32 %s9, 2
    %s22 = sadd.s32 1, %s17
    %p23 = scmp.ge.s32.totalorder %s22, 1
    %s24 = scalar_select %p23, 0, %s22
    %s25 = sadd.s32 1, %s16
    %s26 = scalar_select %p23, %s25, %s16
    %p27 = scmp.ge.s32.totalorder %s26, 2
    %s28 = scalar_select %p27, 0, %s26
    %s29 = ssub.s32 %s16, %s28
    %s30 = ssub.s32 %s17, %s24
    %s31 = sor.u32 %s29, %s30
    %p32 = scmp.eq.s32.totalorder %s31, 0
    %s34 = sadd.s32 %s33, 1
    %s35 = scalar_select %p32, %s33, %s34
    %p38 = pneg %p32
    %p39 = scmp.eq.s32.totalorder %s9, 1
    %p40 = por %p38, %p39
    %p41 = scmp.ne.s32.totalorder %s33, %s36
    %p42 = scmp.eq.s32.totalorder %s9, 0
    %p43 = por %p41, %p42
    %p44 = scmp.ne.s32.totalorder %s33, %s36
    %p45 = scmp.eq.s32.totalorder %s14, 1
    %p46 = por %p44, %p45
    %p47 = scmp.ne.s32.totalorder %s36, %s37
    %p48 = scmp.eq.s32.totalorder %s14, 0
    %p49 = por %p47, %p48
    %p50 = scmp.ne.s32.totalorder %s36, %s37
    %p51 = scmp.eq.s32.totalorder %s15, 1
    %p52 = por %p50, %p51
    %p54 = scmp.ne.s32.totalorder %s37, %s53
    %p55 = scmp.eq.s32.totalorder %s15, 0
    %p56 = por %p54, %p55
    %s57 = ssub.s32 %s16, %s28
    %p58 = scmp.eq.s32.totalorder %s57, 0
    %s60 = sadd.s32 %s59, 1
    %s61 = scalar_select %p58, %s59, %s60
    %p64 = pneg %p58
    %p65 = scmp.eq.s32.totalorder %s9, 1
    %p66 = por %p64, %p65
    %p67 = scmp.ne.s32.totalorder %s59, %s62
    %p68 = scmp.eq.s32.totalorder %s9, 0
    %p69 = por %p67, %p68
    %p70 = scmp.ne.s32.totalorder %s59, %s62
    %p71 = scmp.eq.s32.totalorder %s14, 1
    %p72 = por %p70, %p71
    %p73 = scmp.ne.s32.totalorder %s62, %s63
    %p74 = scmp.eq.s32.totalorder %s14, 0
    %p75 = por %p73, %p74
    %p76 = scmp.ne.s32.totalorder %s62, %s63
    %p77 = scmp.eq.s32.totalorder %s15, 1
    %p78 = por %p76, %p77
    %p80 = scmp.ne.s32.totalorder %s63, %s79
    %p81 = scmp.eq.s32.totalorder %s15, 0
    %p82 = por %p80, %p81
    %s83 = ssub.s32 %s16, %s28
    %s84 = ssub.s32 %s17, %s24
    %s85 = sor.u32 %s83, %s84
    %p86 = scmp.eq.s32.totalorder %s85, 0
    %s88 = sadd.s32 %s87, 1
    %s89 = scalar_select %p86, %s87, %s88
    %p92 = pneg %p86
    %p93 = scmp.eq.s32.totalorder %s9, 1
    %p94 = por %p92, %p93
    %p95 = scmp.ne.s32.totalorder %s87, %s90
    %p96 = scmp.eq.s32.totalorder %s9, 0
    %p97 = por %p95, %p96
    %p98 = scmp.ne.s32.totalorder %s87, %s90
    %p99 = scmp.eq.s32.totalorder %s14, 1
    %p100 = por %p98, %p99
    %p101 = scmp.ne.s32.totalorder %s90, %s91
    %p102 = scmp.eq.s32.totalorder %s14, 0
    %p103 = por %p101, %p102
    %p104 = scmp.ne.s32.totalorder %s90, %s91
    %p105 = scmp.eq.s32.totalorder %s15, 1
    %p106 = por %p104, %p105
    %p108 = scmp.ne.s32.totalorder %s91, %s107
    %p109 = scmp.eq.s32.totalorder %s15, 0
    %p110 = por %p108, %p109
    %s111 = ssub.s32 %s16, %s28
    %s112 = ssub.s32 %s17, %s24
    %s113 = sor.u32 %s111, %s112
    %p114 = scmp.eq.s32.totalorder %s113, 0
    %s116 = sadd.s32 %s115, 1
    %s117 = scalar_select %p114, %s115, %s116
    %p120 = pneg %p114
    %p121 = scmp.eq.s32.totalorder %s9, 1
    %p122 = por %p120, %p121
    %p123 = scmp.ne.s32.totalorder %s115, %s118
    %p124 = scmp.eq.s32.totalorder %s9, 0
    %p125 = por %p123, %p124
    %p126 = scmp.ne.s32.totalorder %s115, %s118
    %p127 = scmp.eq.s32.totalorder %s14, 1
    %p128 = por %p126, %p127
    %p129 = scmp.ne.s32.totalorder %s118, %s119
    %p130 = scmp.eq.s32.totalorder %s14, 0
    %p131 = por %p129, %p130
    %p132 = scmp.ne.s32.totalorder %s118, %s119
    %p133 = scmp.eq.s32.totalorder %s15, 1
    %p134 = por %p132, %p133
    %p136 = scmp.ne.s32.totalorder %s119, %s135
    %p137 = scmp.eq.s32.totalorder %s15, 0
    %p138 = por %p136, %p137
    %p139 = scmp.le.s32.totalorder 1, %s9
    %p140 = scmp.lt.s32.totalorder %s9, 3
    %p141 = pnand %p139, %p140
    %p142 = pneg %p141
    // Predicated region
    $region9: #{my_layer_forward.3} parent=5 // pred_check
      _
    $region10: #{my_layer_forward.3} parent=5 // pred_check_branch
      %144 = sbr.rel (%p141) target = $region12
    $region11: #{my_layer_forward.3} parent=5 // pred_region
      %s145 = ssub.s32 %s9, 1
    $region12: #{my_layer_forward.3} parent=5 // pred_fallthru
      _
    %p146 = scmp.lt.s32.totalorder %s9, 2
    // Predicated region
    $region13: #{my_layer_forward.3} parent=5 // pred_check
      %p147 = pneg %p146
    $region14: #{my_layer_forward.3} parent=5 // pred_check_branch
      %149 = sbr.rel (%p147) target = $region16
    $region15: #{my_layer_forward.3} parent=5 // pred_region
      // Predicated region
      $region17: #{my_layer_forward.3} parent=15 // pred_check
        %p150 = pneg %p43
      $region18: #{my_layer_forward.3} parent=15 // pred_check_branch
        %152 = sbr.rel (%p150) target = $region20
      $region19: #{my_layer_forward.3} parent=15 // pred_region
        %s153 = smul.u32 2, %s17
        %p154 = scmp.lt.s32.totalorder %s16, 1
        %s155 = scalar_select %p154, %s16, 1
        %p156 = scmp.lt.s32.totalorder %s153, 1
        %s157 = scalar_select %p156, %s153, 1
        %s158 = smul.addr %s155, 8
        %s159 = sadd.s32 %s157, %s158
        %s160 = smul.addr %s159, 8
        %s161 = scalar_lea.vmem %s0, %s160
        %s162 = smul.u32 2, %s17
      $region20: #{my_layer_forward.3} parent=15 // pred_fallthru
        _
      // Predicated region
      $region21: #{my_layer_forward.3} parent=15 // pred_check
        %p163 = pneg %p69
      $region22: #{my_layer_forward.3} parent=15 // pred_check_branch
        %165 = sbr.rel (%p163) target = $region24
      $region23: #{my_layer_forward.3} parent=15 // pred_region
        %p166 = scmp.lt.s32.totalorder %s16, 1
        %s167 = scalar_select %p166, %s16, 1
        %s168 = smul.addr %s167, 4
        %s169 = smul.addr %s168, 8
        %s170 = scalar_lea.vmem %s1, %s169
      $region24: #{my_layer_forward.3} parent=15 // pred_fallthru
        _
      // Predicated region
      $region25: #{my_layer_forward.3} parent=15 // pred_check
        %p171 = pneg %p97
      $region26: #{my_layer_forward.3} parent=15 // pred_check_branch
        %173 = sbr.rel (%p171) target = $region28
      $region27: #{my_layer_forward.3} parent=15 // pred_region
        %s174 = smul.u32 2, %s17
        %p175 = scmp.lt.s32.totalorder %s16, 1
        %s176 = scalar_select %p175, %s16, 1
        %p177 = scmp.lt.s32.totalorder %s174, 1
        %s178 = scalar_select %p177, %s174, 1
        %s179 = smul.addr %s176, 2
        %s180 = sadd.s32 %s178, %s179
        %s181 = scalar_lea.vmem %s2, %s180
        %s182 = smul.u32 2, %s17
      $region28: #{my_layer_forward.3} parent=15 // pred_fallthru
        _
    $region16: #{my_layer_forward.3} parent=5 // pred_fallthru
      _
    %p183 = scmp.le.s32.totalorder 1, %s9
    %p184 = scmp.lt.s32.totalorder %s9, 3
    %p185 = pnand %p183, %p184
    %p186 = pneg %p185
    // Predicated region
    $region29: #{my_layer_forward.3} parent=5 // pred_check
      _
    $region30: #{my_layer_forward.3} parent=5 // pred_check_branch
      %188 = sbr.rel (%p185) target = $region32
    $region31: #{my_layer_forward.3} parent=5 // pred_region
      %s189 = ssub.s32 %s9, 1
      %s190 = smul.u32 2, %s19
      %p191 = scmp.lt.s32.totalorder %s18, 1
      %s192 = scalar_select %p191, %s18, 1
      %p193 = scmp.lt.s32.totalorder %s190, 1
      %s194 = scalar_select %p193, %s190, 1
      %s195 = smul.addr %s192, 8
      %s196 = sadd.s32 %s194, %s195
      %s197 = smul.addr %s196, 8
      %s198 = scalar_lea.vmem %s0, %s197
      %p199 = pneg %p49
      %p200 = pneg %p46
      %p201 = scmp.lt.s32.totalorder %s18, 1
      %s202 = scalar_select %p201, %s18, 1
      %s203 = smul.addr %s202, 4
      %s204 = smul.addr %s203, 8
      %s205 = scalar_lea.vmem %s1, %s204
      %p206 = pneg %p75
      %p207 = pneg %p72
      %s208 = smul.u32 2, %s19
      %p209 = scmp.lt.s32.totalorder %s18, 1
      %s210 = scalar_select %p209, %s18, 1
      %p211 = scmp.lt.s32.totalorder %s208, 1
      %s212 = scalar_select %p211, %s208, 1
      %s213 = smul.addr %s210, 2
      %s214 = sadd.s32 %s212, %s213
      %s215 = scalar_lea.vmem %s2, %s214
      %p216 = pneg %p103
      %p217 = pneg %p100
      %p218 = pneg %p131
      %p219 = pneg %p128
      %s220 = smul.u32 2, %s19
      %p221 = scmp.lt.s32.totalorder %s18, 1
      %s222 = scalar_select %p221, %s18, 1
      %p223 = scmp.lt.s32.totalorder %s220, 1
      %s224 = scalar_select %p223, %s220, 1
      %s225 = smul.addr %s222, 8
      %s226 = sadd.s32 %s224, %s225
      %s227 = smul.addr %s226, 8
      %s228 = scalar_lea.vmem %s3, %s227
      %s229 = smul.u32 2, %s19
      %p230 = scmp.lt.s32.totalorder %s18, 1
      %s231 = scalar_select %p230, %s18, 1
      %p232 = scmp.lt.s32.totalorder %s229, 1
      %s233 = scalar_select %p232, %s229, 1
      %s234 = smul.addr %s231, 8
      %s235 = sadd.s32 %s233, %s234
      %s236 = smul.addr %s235, 8
      %s237 = scalar_lea.vmem %s0, %s236
      %s238 = smul.u32 2, %s19
      %p239 = scmp.lt.s32.totalorder %s18, 1
      %s240 = scalar_select %p239, %s18, 1
      %s241 = smul.addr %s240, 4
      %s242 = smul.addr %s241, 8
      %s243 = scalar_lea.vmem %s1, %s242
      %s244 = smul.u32 2, %s19
      %p245 = scmp.lt.s32.totalorder %s18, 1
      %s246 = scalar_select %p245, %s18, 1
      %p247 = scmp.lt.s32.totalorder %s244, 1
      %s248 = scalar_select %p247, %s244, 1
      %s249 = smul.addr %s246, 2
      %s250 = sadd.s32 %s248, %s249
      %s251 = scalar_lea.vmem %s2, %s250
      %s252 = smul.u32 2, %s19
      %s253 = smul.u32 2, %s19
      %p254 = scmp.lt.s32.totalorder %s18, 1
      %s255 = scalar_select %p254, %s18, 1
      %p256 = scmp.lt.s32.totalorder %s253, 1
      %s257 = scalar_select %p256, %s253, 1
      %s258 = smul.addr %s255, 8
      %s259 = sadd.s32 %s257, %s258
      %s260 = smul.addr %s259, 8
      %s261 = scalar_lea.vmem %s3, %s260
      %s262 = smul.u32 2, %s19
      %v263 = vld [vmem:[%s243] sm:$0xff]
      %v264 = vld [vmem:[%s243 + $0x8] sm:$0xff]
      %v265 = vld [vmem:[%s243 + $0x10] sm:$0xff]
      %v266 = vld [vmem:[%s243 + $0x18] sm:$0xff]
      %v267 = vld [vmem:[%s251] sm:$0x3]
      %269 = vset.pattern.permute.xlu0 0
      %270 = vperm.xlu0 %269, %v263
      %v271 = vpop.permute.xlu0 %270
      %274 = vset.pattern.permute.xlu0 0
      %275 = vperm.xlu0 %274, %v264
      %v276 = vpop.permute.xlu0 %275
      %279 = vset.pattern.permute.xlu0 0
      %280 = vperm.xlu0 %279, %v265
      %v281 = vpop.permute.xlu0 %280
      %284 = vset.pattern.permute.xlu0 0
      %285 = vperm.xlu0 %284, %v266
      %v286 = vpop.permute.xlu0 %285
      %v289 = vlaneseq
      %v290 = vshrl.u32 %v289, 7
      %v291 = vsub.s32 0, %v290
      %v292 = vrot.slane %v267, %v291
      %v293 = vlaneseq
      %v294 = vshrl.u32 %v293, 7
      %v295 = vsub.s32 1, %v294
      %v296 = vrot.slane %v267, %v295
      %v299 = vadd.f32 %v271, %v292
      %v300 = vadd.f32 %v271, %v296
      %v301 = vadd.f32 %v276, %v292
      %v302 = vadd.f32 %v276, %v296
      %v303 = vadd.f32 %v281, %v292
      %v304 = vadd.f32 %v281, %v296
      %v305 = vadd.f32 %v286, %v292
      %v306 = vadd.f32 %v286, %v296
      %v307 = vsub.f32 0.0, %v299
      %v308 = vsub.f32 0.0, %v300
      %v309 = vsub.f32 0.0, %v301
      %v310 = vsub.f32 0.0, %v302
      %v311 = vsub.f32 0.0, %v303
      %v312 = vsub.f32 0.0, %v304
      %v313 = vsub.f32 0.0, %v305
      %v314 = vsub.f32 0.0, %v306
      %v315 = vmul.f32 %v307, 1.442695
      %v316 = vpow.pop %v315
      %v317 = vmul.f32 %v308, 1.442695
      %v318 = vpow.pop %v317
      %v319 = vmul.f32 %v309, 1.442695
      %v320 = vpow.pop %v319
      %v321 = vmul.f32 %v310, 1.442695
      %v322 = vpow.pop %v321
      %v323 = vmul.f32 %v311, 1.442695
      %v324 = vpow.pop %v323
      %v325 = vmul.f32 %v312, 1.442695
      %v326 = vpow.pop %v325
      %v327 = vmul.f32 %v313, 1.442695
      %v328 = vpow.pop %v327
      %v329 = vmul.f32 %v314, 1.442695
      %v330 = vpow.pop %v329
      %v331 = vadd.f32 %v316, 1.0
      %v332 = vadd.f32 %v318, 1.0
      %v333 = vadd.f32 %v320, 1.0
      %v334 = vadd.f32 %v322, 1.0
      %v335 = vadd.f32 %v324, 1.0
      %v336 = vadd.f32 %v326, 1.0
      %v337 = vadd.f32 %v328, 1.0
      %v338 = vadd.f32 %v330, 1.0
      %v339 = vrcp.pop %v331
      %v340 = vrcp.pop %v332
      %v341 = vrcp.pop %v333
      %v342 = vrcp.pop %v334
      %v343 = vrcp.pop %v335
      %v344 = vrcp.pop %v336
      %v345 = vrcp.pop %v337
      %v346 = vrcp.pop %v338
      %v347 = vld [vmem:[%s237] sm:$0xff]
      %v348 = vld [vmem:[%s237 + $0x8] sm:$0xff]
      %v349 = vld [vmem:[%s237 + $0x10] sm:$0xff]
      %v350 = vld [vmem:[%s237 + $0x18] sm:$0xff]
      %v351 = vld [vmem:[%s237 + $0x20] sm:$0xff]
      %v352 = vld [vmem:[%s237 + $0x28] sm:$0xff]
      %v353 = vld [vmem:[%s237 + $0x30] sm:$0xff]
      %v354 = vld [vmem:[%s237 + $0x38] sm:$0xff]
      %v355 = vmul.f32 %v347, %v339
      %v356 = vmul.f32 %v348, %v340
      %v357 = vmul.f32 %v349, %v341
      %v358 = vmul.f32 %v350, %v342
      %v359 = vmul.f32 %v351, %v343
      %v360 = vmul.f32 %v352, %v344
      %v361 = vmul.f32 %v353, %v345
      %v362 = vmul.f32 %v354, %v346
      %363 = vst [vmem:[%s261] sm:$0xff] %v355
      %364 = vst [vmem:[%s261 + $0x8] sm:$0xff] %v356
      %365 = vst [vmem:[%s261 + $0x10] sm:$0xff] %v357
      %366 = vst [vmem:[%s261 + $0x18] sm:$0xff] %v358
      %367 = vst [vmem:[%s261 + $0x20] sm:$0xff] %v359
      %368 = vst [vmem:[%s261 + $0x28] sm:$0xff] %v360
      %369 = vst [vmem:[%s261 + $0x30] sm:$0xff] %v361
      %370 = vst [vmem:[%s261 + $0x38] sm:$0xff] %v362
      %s371 = smul.u32 2, %s19
      %p372 = scmp.lt.s32.totalorder %s18, 1
      %s373 = scalar_select %p372, %s18, 1
      %p374 = scmp.lt.s32.totalorder %s371, 1
      %s375 = scalar_select %p374, %s371, 1
      %s376 = smul.addr %s373, 8
      %s377 = sadd.s32 %s375, %s376
      %s378 = smul.addr %s377, 8
      %s379 = scalar_lea.vmem %s3, %s378
      // Predicated region
      $region33: #{my_layer_forward.3} parent=31 // pred_check
        %p380 = pneg %p128
      $region34: #{my_layer_forward.3} parent=31 // pred_check_branch
        %382 = sbr.rel (%p380) target = $region36
      $region35: #{my_layer_forward.3} parent=31 // pred_region
        %s383 = smul.u32 2, %s19
      $region36: #{my_layer_forward.3} parent=31 // pred_fallthru
        _
    $region32: #{my_layer_forward.3} parent=5 // pred_fallthru
      _
    %p384 = scmp.le.s32.totalorder 2, %s9
    // Predicated region
    $region37: #{my_layer_forward.3} parent=5 // pred_check
      %p385 = pneg %p384
    $region38: #{my_layer_forward.3} parent=5 // pred_check_branch
      %387 = sbr.rel (%p385) target = $region40
    $region39: #{my_layer_forward.3} parent=5 // pred_region
      %s388 = ssub.s32 %s9, 2
      // Predicated region
      $region41: #{my_layer_forward.3} parent=39 // pred_check
        %p389 = pneg %p134
      $region42: #{my_layer_forward.3} parent=39 // pred_check_branch
        %391 = sbr.rel (%p389) target = $region44
      $region43: #{my_layer_forward.3} parent=39 // pred_region
        %s392 = smul.u32 2, %s21
        %p393 = scmp.lt.s32.totalorder %s20, 1
        %s394 = scalar_select %p393, %s20, 1
        %p395 = scmp.lt.s32.totalorder %s392, 1
        %s396 = scalar_select %p395, %s392, 1
        %s397 = smul.addr %s394, 8
        %s398 = sadd.s32 %s396, %s397
        %s399 = smul.addr %s398, 8
        %s400 = scalar_lea.vmem %s3, %s399
      $region44: #{my_layer_forward.3} parent=39 // pred_fallthru
        _
    $region40: #{my_layer_forward.3} parent=5 // pred_fallthru
      _
  $region6: #{my_layer_forward.3} parent=0 // loop_footer
    %s13 = sadd.s32 1, %s9
  $region7: #{my_layer_forward.3} parent=0 // loop_footer_branch
    %8 = sbr.rel target = $region3
  $region8: #{my_layer_forward.3} parent=0 // loop_exit
    _

</llo_original>
